<compile_context>
chip_gen: v7x
topology: tpu7x:2x2x1
jax: 0.10.0
libtpu: 0.0.40
codegen_flags: <defaults>
</compile_context>

<pallas_src>
import functools

import numpy as np

import jax
import jax.numpy as jnp
from jax.experimental import pallas as pl
from jax.experimental.pallas import tpu as pltpu


VMEM_LIMIT = 48 * 1024 * 1024


def _round_up(x, m):
    return ((x + m - 1) // m) * m


# ----------------------------------------------------------------------------
# Pallas kernels
# ----------------------------------------------------------------------------

def _matmul_affine_kernel(x_ref, w_ref, s_ref, b_ref, o_ref, *, relu):
    """o = act((x @ w) * scale + bias); bf16 operands, f32 epilogue."""
    y = jnp.dot(x_ref[...], w_ref[...], preferred_element_type=jnp.float32)
    y = y * s_ref[...] + b_ref[...]
    if relu:
        y = jnp.maximum(y, 0.0)
    o_ref[...] = y.astype(o_ref.dtype)


def matmul_affine(x, w, scale, bias, *, relu, out_dtype=jnp.float32, tm=512):
    """Row-tiled fused matmul + affine (+ReLU).  x:(M,K) w:(K,N) -> (M,N)."""
    M, K = x.shape
    N = w.shape[1]
    tm_eff = min(tm, _round_up(M, 8))
    Mp = _round_up(M, tm_eff)
    x_p = jnp.pad(x.astype(jnp.bfloat16), ((0, Mp - M), (0, 0)))
    out = pl.pallas_call(
        functools.partial(_matmul_affine_kernel, relu=relu),
        out_shape=jax.ShapeDtypeStruct((Mp, N), out_dtype),
        grid_spec=pltpu.PrefetchScalarGridSpec(
            num_scalar_prefetch=0,
            grid=(Mp // tm_eff,),
            in_specs=[
                pl.BlockSpec((tm_eff, K), lambda i: (i, 0)),
                pl.BlockSpec((K, N), lambda i: (0, 0)),
                pl.BlockSpec((1, N), lambda i: (0, 0)),
                pl.BlockSpec((1, N), lambda i: (0, 0)),
            ],
            out_specs=pl.BlockSpec((tm_eff, N), lambda i: (i, 0)),
        ),
        compiler_params=pltpu.CompilerParams(
            dimension_semantics=("parallel",), vmem_limit_bytes=VMEM_LIMIT),
    )(x_p, w.astype(jnp.bfloat16),
      scale.reshape(1, N).astype(jnp.float32),
      bias.reshape(1, N).astype(jnp.float32))
    return out[:M]


def _pfn_kernel(f_ref, w_ref, s_ref, b_ref, o_ref):
    """PillarVFE PFN layer: linear -> BN(folded) -> ReLU -> max over points."""
    f = f_ref[...]                                   # (tv, P, Cin) bf16
    y = jax.lax.dot_general(f, w_ref[...], (((2,), (0,)), ((), ())),
                            preferred_element_type=jnp.float32)
    y = y * s_ref[...] + b_ref[...]
    y = jnp.maximum(y, 0.0)
    o_ref[...] = jnp.max(y, axis=1).astype(o_ref.dtype)


def pfn_forward(features, w, scale, bias, *, tv=256):
    Nv, P, Cin = features.shape
    Cout = w.shape[1]
    tv_eff = min(tv, _round_up(Nv, 8))
    Np = _round_up(Nv, tv_eff)
    f_p = jnp.pad(features.astype(jnp.bfloat16),
                  ((0, Np - Nv), (0, 0), (0, 0)))
    out = pl.pallas_call(
        _pfn_kernel,
        out_shape=jax.ShapeDtypeStruct((Np, Cout), jnp.bfloat16),
        grid_spec=pltpu.PrefetchScalarGridSpec(
            num_scalar_prefetch=0,
            grid=(Np // tv_eff,),
            in_specs=[
                pl.BlockSpec((tv_eff, P, Cin), lambda i: (i, 0, 0)),
                pl.BlockSpec((Cin, Cout), lambda i: (0, 0)),
                pl.BlockSpec((1, 1, Cout), lambda i: (0, 0, 0)),
                pl.BlockSpec((1, 1, Cout), lambda i: (0, 0, 0)),
            ],
            out_specs=pl.BlockSpec((tv_eff, Cout), lambda i: (i, 0)),
        ),
        compiler_params=pltpu.CompilerParams(
            dimension_semantics=("parallel",), vmem_limit_bytes=VMEM_LIMIT),
    )(f_p, w, scale, bias)
    return out[:Nv]


def _conv3x3_kernel(x_ref, w_ref, s_ref, b_ref, o_ref, *, stride, Ho, Lph):
    """Fused 3x3 conv: 9 accumulating taps, BN(folded)+ReLU epilogue.

    x_ref block: (1, 3*stride*Lph, Wo, Cin) -- per (dx, H-phase) band.
    """
    Cout = w_ref.shape[-1]
    Wo = o_ref.shape[2]
    acc = jnp.zeros((Ho, Wo, Cout), jnp.float32)
    for dy in range(3):
        for dx in range(3):
            g = dx * stride + (dy % stride)
            base = g * Lph + dy // stride
            xb = x_ref[0, base:base + Ho, :, :]      # (Ho, Wo, Cin) bf16
            acc = acc + jax.lax.dot_general(
                xb, w_ref[dy, dx], (((2,), (0,)), ((), ())),
                preferred_element_type=jnp.float32)
    y = jnp.maximum(acc * s_ref[...] + b_ref[...], 0.0)
    o_ref[...] = y[None].astype(o_ref.dtype)


def conv3x3_bn_relu(x, w, scale, bias, stride):
    """x:(N,H,W,Cin) NHWC bf16, w:(3,3,Cin,Cout) bf16, pad=1, BN(eval)+ReLU."""
    N, H, W, Cin = x.shape
    Cout = w.shape[-1]
    s = stride
    Ho = (H - 1) // s + 1
    Wo = (W - 1) // s + 1
    xp = jnp.pad(x, ((0, 0), (1, 1), (1, 1), (0, 0)))
    Hp2, Wp2 = H + 2, W + 2
    # Partial im2col fusion: pre-shift/stride the 3 column taps (3x data, not
    # 9x) so in-kernel slices only touch leading (untiled) dims.
    shifts = [jax.lax.slice(xp, (0, 0, dx, 0),
                            (N, Hp2, dx + s * (Wo - 1) + 1, Cin),
                            (1, 1, s, 1)) for dx in range(3)]
    xs = jnp.stack(shifts, axis=1)                    # (N, 3, Hp2, Wo, Cin)
    Hp2p = _round_up(Hp2, s)
    if Hp2p > Hp2:
        xs = jnp.pad(xs, ((0, 0), (0, 0), (0, Hp2p - Hp2), (0, 0), (0, 0)))
    Lph = Hp2p // s
    # H phases: phase p holds rows p, p+s, ...  Tap dy -> phase dy%s @ dy//s.
    xph = jnp.stack([xs[:, :, p::s] for p in range(s)], axis=2)
    xph = xph.reshape(N, 3 * s * Lph, Wo, Cin)
    out = pl.pallas_call(
        functools.partial(_conv3x3_kernel, stride=s, Ho=Ho, Lph=Lph),
        out_shape=jax.ShapeDtypeStruct((N, Ho, Wo, Cout), jnp.bfloat16),
        grid_spec=pltpu.PrefetchScalarGridSpec(
            num_scalar_prefetch=0,
            grid=(N,),
            in_specs=[
                pl.BlockSpec((1, 3 * s * Lph, Wo, Cin),
                             lambda n: (n, 0, 0, 0)),
                pl.BlockSpec((3, 3, Cin, Cout), lambda n: (0, 0, 0, 0)),
                pl.BlockSpec((1, 1, Cout), lambda n: (0, 0, 0)),
                pl.BlockSpec((1, 1, Cout), lambda n: (0, 0, 0)),
            ],
            out_specs=pl.BlockSpec((1, Ho, Wo, Cout), lambda n: (n, 0, 0, 0)),
        ),
        compiler_params=pltpu.CompilerParams(
            dimension_semantics=("parallel",), vmem_limit_bytes=VMEM_LIMIT),
    )(xph, w, scale, bias)
    return out


def _att_fuse_kernel(x_ref, m_ref, o_ref, *, inv_sqrt_dim):
    """Per-pixel scaled-dot-product attention across CAVs (ego query)."""
    x = x_ref[0].astype(jnp.float32)                           # (t, L, C)
    scores = jnp.sum(x[:, 0:1, :] * x, axis=-1) * inv_sqrt_dim + m_ref[0]
    scores = scores - jnp.max(scores, axis=-1, keepdims=True)
    e = jnp.exp(scores)
    denom = jnp.sum(e, axis=-1, keepdims=True)
    attn = e * pl.reciprocal(denom, approx=True)
    fused = jnp.sum(attn[:, :, None] * x, axis=1)              # (t, C)
    o_ref[...] = fused[None].astype(o_ref.dtype)


def att_fusion(x, record_len, *, thw=512):
    """x: (sum(record_len), H, W, C) NHWC bf16 -> (len(record_len), H, W, C)."""
    sumN, H, W, C = x.shape
    B = len(record_len)
    L = max(record_len)
    HW = H * W
    xf = x.reshape(sumN, HW, C)
    groups = []
    start = 0
    for n in record_len:
        g = xf[start:start + n]
        if n < L:
            g = jnp.pad(g, ((0, L - n), (0, 0), (0, 0)))
        groups.append(jnp.transpose(g, (1, 0, 2)))             # (HW, L, C)
        start += n
    xg = jnp.stack(groups, axis=0)                             # (B, HW, L, C)

    mask = np.full((B, 1, L), -1e9, np.float32)
    for b, n in enumerate(record_len):
        mask[b, 0, :n] = 0.0
    mask = jnp.asarray(mask)

    t = min(thw, _round_up(HW, 8))
    HWp = _round_up(HW, t)
    if HWp > HW:
        xg = jnp.pad(xg, ((0, 0), (0, HWp - HW), (0, 0), (0, 0)))

    out = pl.pallas_call(
        functools.partial(_att_fuse_kernel,
                          inv_sqrt_dim=1.0 / float(C) ** 0.5),
        out_shape=jax.ShapeDtypeStruct((B, HWp, C), jnp.bfloat16),
        grid_spec=pltpu.PrefetchScalarGridSpec(
            num_scalar_prefetch=0,
            grid=(B, HWp // t),
            in_specs=[
                pl.BlockSpec((1, t, L, C), lambda b, i: (b, i, 0, 0)),
                pl.BlockSpec((1, 1, L), lambda b, i: (b, 0, 0)),
            ],
            out_specs=pl.BlockSpec((1, t, C), lambda b, i: (b, i, 0)),
        ),
        compiler_params=pltpu.CompilerParams(
            dimension_semantics=("parallel", "parallel"),
            vmem_limit_bytes=VMEM_LIMIT),
    )(xg, mask)
    return out[:, :HW].reshape(B, H, W, C)


# ----------------------------------------------------------------------------
# Deconv / heads wrappers (matmul in Pallas, pixel-shuffle glue in XLA)
# ----------------------------------------------------------------------------

def deconv_bn_relu(x, w2d, scale_t, bias_t, stride):
    """ConvTranspose2d(kernel=stride=s) + BN(eval) + ReLU, NHWC in/out."""
    N, H, W, Cin = x.shape
    s = stride
    Cout = w2d.shape[1] // (s * s)
    cols = x.reshape(N * H * W, Cin)
    y = matmul_affine(cols, w2d, scale_t, bias_t, relu=True,
                      out_dtype=jnp.bfloat16)
    y = y.reshape(N, H, W, s, s, Cout)
    if s == 1:
        return y.reshape(N, H, W, Cout)
    # depth-to-space stays a single XLA transpose per deconv (NHWC, bf16).
    y = jnp.transpose(y, (0, 1, 3, 2, 4, 5))
    return y.reshape(N, H * s, W * s, Cout)


def detection_heads(x2d, kp):
    """Fused cls + reg 1x1 heads: one matmul over the 384-ch feature map."""
    B, H, W, C = x2d.shape
    y = matmul_affine(x2d.reshape(B * H * W, C), kp['head_w'],
                      kp['head_scale'], kp['head_b'], relu=False,
                      out_dtype=jnp.float32)
    y = y.reshape(B, H, W, -1)
    psm = jnp.transpose(y[..., :2], (0, 3, 1, 2))    # NCHW outputs (PyTorch)
    rm = jnp.transpose(y[..., 2:], (0, 3, 1, 2))
    return psm, rm


# ----------------------------------------------------------------------------
# Sub-modules
# ----------------------------------------------------------------------------

def pillar_vfe(voxel_features, voxel_num_points, voxel_coords, kp, cfg):
    vx, vy, vz = cfg['voxel_size']
    x_off = vx / 2.0 + cfg['pc_range'][0]
    y_off = vy / 2.0 + cfg['pc_range'][1]
    z_off = vz / 2.0 + cfg['pc_range'][2]

    num = jnp.maximum(voxel_num_points, 1).astype(jnp.float32).reshape(-1, 1, 1)
    points_mean = voxel_features[:, :, :3].sum(axis=1, keepdims=True) / num
    f_cluster = voxel_features[:, :, :3] - points_mean

    coords_f = voxel_coords.astype(jnp.float32)
    fx = voxel_features[:, :, 0] - (coords_f[:, 3:4] * vx + x_off)
    fy = voxel_features[:, :, 1] - (coords_f[:, 2:3] * vy + y_off)
    fz = voxel_features[:, :, 2] - (coords_f[:, 1:2] * vz + z_off)
    f_center = jnp.stack([fx, fy, fz], axis=-1)

    features = jnp.concatenate([voxel_features, f_cluster, f_center], axis=-1)
    P = features.shape[1]
    mask = (jnp.arange(P)[None, :] < voxel_num_points[:, None]).astype(jnp.float32)
    features = features * mask[:, :, None]

    return pfn_forward(features, kp['pfn_w'], kp['pfn_scale'], kp['pfn_bias'])


def point_pillar_scatter(pillar_features, coords, batch_size, cfg):
    # TODO(synk): data-dependent scatter to the BEV canvas stays in plain JAX.
    C = cfg['num_bev_features']
    nx, ny = cfg['nx'], cfg['ny']
    flat_idx = coords[:, 1] + coords[:, 2] * nx + coords[:, 3]
    canvas = jnp.zeros((batch_size, ny * nx, C), pillar_features.dtype)
    canvas = canvas.at[coords[:, 0], flat_idx, :].set(pillar_features)
    return canvas.reshape(batch_size, ny, nx, C)     # NHWC


def att_bev_backbone(spatial_features, record_len, kp):
    x = spatial_features
    ups = []
    for i in range(3):
        x = conv3x3_bn_relu(x, kp[f'b{i}_c0_w'],
                            kp[f'b{i}_c0_s'], kp[f'b{i}_c0_b'], stride=2)
        x = conv3x3_bn_relu(x, kp[f'b{i}_c1_w'],
                            kp[f'b{i}_c1_s'], kp[f'b{i}_c1_b'], stride=1)
        x_fuse = att_fusion(x, record_len)
        ups.append(deconv_bn_relu(x_fuse, kp[f'd{i}_w2d'],
                                  kp[f'd{i}_scale'], kp[f'd{i}_bias'],
                                  kp[f'd{i}_stride']))
    return jnp.concatenate(ups, axis=-1)             # (B, H, W, 384)


# ----------------------------------------------------------------------------
# Full forward
# ----------------------------------------------------------------------------

def forward(data_dict, kp, cfg):
    voxel_features = data_dict['processed_lidar']['voxel_features']
    voxel_coords = data_dict['processed_lidar']['voxel_coords']
    voxel_num_points = data_dict['processed_lidar']['voxel_num_points']
    record_len = list(data_dict['record_len'])       # host-static metadata
    pairwise_t_matrix = data_dict['pairwise_t_matrix']
    BS, _, K, _, _ = pairwise_t_matrix.shape
    delay = cfg['time_delay']

    # PillarVFE
    pillar_features = pillar_vfe(voxel_features, voxel_num_points,
                                 voxel_coords, kp, cfg)
    # Scatter to BEV (NHWC, bf16)
    batch_size = sum(record_len) * K
    spatial_features = point_pillar_scatter(pillar_features, voxel_coords,
                                            batch_size, cfg)

    # regroup(spatial_features, record_len * K) + delayed-frame selection
    cur_list = []
    start = 0
    for i in range(BS):
        cav_num = record_len[i]
        n_frames = cav_num * K
        blk = spatial_features[start:start + n_frames]
        cur_index = list(range(delay, cav_num * K + delay, K))
        cur_index[0] = 0
        cur_list.append(blk[jnp.asarray(cur_index)])
        start += n_frames
    cur_spatial_features = jnp.concatenate(cur_list, axis=0)

    # Attention BEV backbone + fused heads
    spatial_features_2d = att_bev_backbone(cur_spatial_features, record_len, kp)
    psm, rm = detection_heads(spatial_features_2d, kp)
    return {'psm': psm, 'rm': rm}


# ----------------------------------------------------------------------------
# Deterministic parameter init (PyTorch layouts) + kernel-layout preparation
# ----------------------------------------------------------------------------

def init_params(key):
    keys = list(jax.random.split(key, 64))
    kit = iter(keys)

    def nrm(shape, std):
        return jax.random.normal(next(kit), shape, jnp.float32) * std

    def bn(c, eps=1e-3):
        gamma = 1.0 + 0.1 * jax.random.normal(next(kit), (c,), jnp.float32)
        beta = 0.1 * jax.random.normal(next(kit), (c,), jnp.float32)
        mean = 0.05 * jax.random.normal(next(kit), (c,), jnp.float32)
        var = 1.0 + 0.1 * jax.random.uniform(next(kit), (c,), jnp.float32)
        scale = gamma / jnp.sqrt(var + eps)
        bias = beta - mean * scale
        return scale, bias

    p = {}
    # PillarVFE: Linear(10 -> 64, bias=False) + BN1d(64)
    p['pfn_w'] = nrm((10, 64), 0.3)
    p['pfn_scale'], p['pfn_bias'] = bn(64)

    # AttBEVBackbone: layer_nums=[1,1,1], strides=[2,2,2], filters=[64,128,256]
    c_in = [64, 64, 128]
    c_out = [64, 128, 256]
    for i in range(3):
        p[f'b{i}_c0_w'] = nrm((c_out[i], c_in[i], 3, 3), 0.05)
        p[f'b{i}_c0_s'], p[f'b{i}_c0_b'] = bn(c_out[i])
        p[f'b{i}_c1_w'] = nrm((c_out[i], c_out[i], 3, 3), 0.05)
        p[f'b{i}_c1_s'], p[f'b{i}_c1_b'] = bn(c_out[i])

    # deblocks: upsample_strides=[1,2,4], num_upsample_filters=[128,128,128]
    up_strides = [1, 2, 4]
    for i in range(3):
        s = up_strides[i]
        p[f'd{i}_w'] = nrm((c_out[i], 128, s, s), 0.05)
        p[f'd{i}_s'], p[f'd{i}_b'] = bn(128)
        p[f'd{i}_stride'] = s

    # heads: anchor_number=2 -> psm 2ch ; 7*anchor_num=14 -> rm 14ch
    p['cls_w'] = nrm((2, 384, 1, 1), 0.05)
    p['cls_b'] = 0.01 * jax.random.normal(next(kit), (2,), jnp.float32)
    p['reg_w'] = nrm((14, 384, 1, 1), 0.05)
    p['reg_b'] = 0.01 * jax.random.normal(next(kit), (14,), jnp.float32)
    return p


def prepare_params(p):
    """Convert PyTorch-layout params to kernel-friendly (bf16, NHWC) layouts."""
    kp = {}
    kp['pfn_w'] = p['pfn_w'].astype(jnp.bfloat16)                # (10, 64)
    kp['pfn_scale'] = p['pfn_scale'].reshape(1, 1, -1).astype(jnp.float32)
    kp['pfn_bias'] = p['pfn_bias'].reshape(1, 1, -1).astype(jnp.float32)

    for i in range(3):
        for j in range(2):
            w = p[f'b{i}_c{j}_w']                                # (Co,Ci,3,3)
            kp[f'b{i}_c{j}_w'] = jnp.transpose(w, (2, 3, 1, 0)).astype(jnp.bfloat16)
            kp[f'b{i}_c{j}_s'] = p[f'b{i}_c{j}_s'].reshape(1, 1, -1).astype(jnp.float32)
            kp[f'b{i}_c{j}_b'] = p[f'b{i}_c{j}_b'].reshape(1, 1, -1).astype(jnp.float32)
        s = p[f'd{i}_stride']
        w = p[f'd{i}_w']                                         # (Ci,128,s,s)
        kp[f'd{i}_w2d'] = jnp.transpose(w, (0, 2, 3, 1)).reshape(
            w.shape[0], -1).astype(jnp.bfloat16)                 # (Ci, s*s*128)
        kp[f'd{i}_scale'] = jnp.tile(p[f'd{i}_s'], s * s).astype(jnp.float32)
        kp[f'd{i}_bias'] = jnp.tile(p[f'd{i}_b'], s * s).astype(jnp.float32)
        kp[f'd{i}_stride'] = s

    w_cat = jnp.concatenate([p['cls_w'].reshape(2, -1),
                             p['reg_w'].reshape(14, -1)], axis=0)  # (16, 384)
    kp['head_w'] = w_cat.T.astype(jnp.bfloat16)                    # (384, 16)
    kp['head_b'] = jnp.concatenate([p['cls_b'], p['reg_b']]).astype(jnp.float32)
    kp['head_scale'] = jnp.ones((16,), jnp.float32)
    return kp


# ----------------------------------------------------------------------------
# Main
# ----------------------------------------------------------------------------

if __name__ == "__main__":
    key = jax.random.PRNGKey(0)

    # synthetic config (small shapes)
    record_len = [2, 1]        # CAVs per sample (host-static metadata)
    K = 2                      # past frames per CAV
    delay = 1                  # args['time_delay']
    BS = len(record_len)
    total_frames = sum(record_len) * K            # 6
    nx = ny = 16
    P = 8                      # max points per pillar
    NV_PER_FRAME = 12
    voxel_size = (0.4, 0.4, 4.0)
    pc_range = (-3.2, -3.2, -3.0, 3.2, 3.2, 1.0)

    cfg = dict(voxel_size=voxel_size, pc_range=pc_range, nx=nx, ny=ny,
               num_bev_features=64, time_delay=delay)

    k_params, k_data = jax.random.split(key)
    params = init_params(k_params)
    kparams = prepare_params(params)

    # synthetic voxelized point clouds (padded points are zeros, as in the
    # OpenCOOD pre-processor)
    keys = jax.random.split(k_data, total_frames * 3)
    vf_all, vc_all, vn_all = [], [], []
    for f in range(total_frames):
        kpos, knum, kpts = keys[3 * f], keys[3 * f + 1], keys[3 * f + 2]
        flat = jax.random.permutation(kpos, nx * ny)[:NV_PER_FRAME]
        yy = flat // nx
        xx = flat % nx
        coords = jnp.stack([jnp.full_like(yy, f), jnp.zeros_like(yy), yy, xx],
                           axis=1)
        num_pts = jax.random.randint(knum, (NV_PER_FRAME,), 1, P + 1)
        cx = xx.astype(jnp.float32) * voxel_size[0] + voxel_size[0] / 2 + pc_range[0]
        cy = yy.astype(jnp.float32) * voxel_size[1] + voxel_size[1] / 2 + pc_range[1]
        cz = jnp.zeros_like(cx) + voxel_size[2] / 2 + pc_range[2]
        base = jnp.stack([cx, cy, cz, jnp.full_like(cx, 0.5)], axis=-1)[:, None, :]
        jitter = jax.random.uniform(kpts, (NV_PER_FRAME, P, 4),
                                    minval=-0.15, maxval=0.15)
        pts = base + jitter
        mask = (jnp.arange(P)[None, :] < num_pts[:, None]).astype(jnp.float32)
        pts = pts * mask[:, :, None]
        vf_all.append(pts)
        vc_all.append(coords)
        vn_all.append(num_pts)

    data_dict = {
        'processed_lidar': {
            'voxel_features': jnp.concatenate(vf_all, axis=0),
            'voxel_coords': jnp.concatenate(vc_all, axis=0).astype(jnp.int32),
            'voxel_num_points': jnp.concatenate(vn_all, axis=0).astype(jnp.int32),
        },
        'record_len': record_len,     # Python list: no device_get / host sync
        'past_k_time_interval': jnp.zeros((sum(record_len),), jnp.float32),
        'pairwise_t_matrix': jnp.tile(jnp.eye(4, dtype=jnp.float32),
                                      (BS, 5, K, 1, 1)),
    }

    out = forward(data_dict, kparams, cfg)
    psm = jax.block_until_ready(out['psm'])
    rm = jax.block_until_ready(out['rm'])

    assert psm.shape == (BS, 2, 8, 8), psm.shape
    assert rm.shape == (BS, 14, 8, 8), rm.shape
    assert jnp.all(jnp.isfinite(psm)) and jnp.all(jnp.isfinite(rm))
    print("KERNEL_OK")
</pallas_src>

<mosaic_0001>
module attributes {stable_mosaic.version = 11 : i64} {
  func.func @_pfn_kernel(%arg0: i32, %arg1: memref<72x8x10xbf16, #tpu.memory_space<vmem>>, %arg2: memref<10x64xbf16, #tpu.memory_space<vmem>>, %arg3: memref<1x1x64xf32, #tpu.memory_space<vmem>>, %arg4: memref<1x1x64xf32, #tpu.memory_space<vmem>>, %arg5: memref<72x64xbf16, #tpu.memory_space<vmem>>) attributes {dimension_semantics = [#tpu.dimension_semantics<parallel>], iteration_bounds = array<i64: 1>, scalar_prefetch = 0 : i64, scratch_operands = 0 : i64, tpu.core_type = #tpu.core_type<tc>, window_params = [{transform_indices = @transform_0, window_bounds = array<i64: 72, 8, 10>}, {pipeline_mode = #tpu.pipeline_mode<synchronous>, transform_indices = @transform_1, window_bounds = array<i64: 10, 64>}, {pipeline_mode = #tpu.pipeline_mode<synchronous>, transform_indices = @transform_2, window_bounds = array<i64: 1, 1, 64>}, {pipeline_mode = #tpu.pipeline_mode<synchronous>, transform_indices = @transform_3, window_bounds = array<i64: 1, 1, 64>}, {transform_indices = @transform_4, window_bounds = array<i64: 72, 64>}]} {
    %c0 = arith.constant 0 : index
    %c0_0 = arith.constant 0 : index
    %c0_1 = arith.constant 0 : index
    %0 = vector.load %arg1[%c0, %c0_0, %c0_1] : memref<72x8x10xbf16, #tpu.memory_space<vmem>>, vector<72x8x10xbf16>
    %c0_2 = arith.constant 0 : index
    %c0_3 = arith.constant 0 : index
    %1 = vector.load %arg2[%c0_2, %c0_3] : memref<10x64xbf16, #tpu.memory_space<vmem>>, vector<10x64xbf16>
    %cst = arith.constant dense<0.000000e+00> : vector<72x8x64xf32>
    %2 = tpu.matmul %0, %1, %cst {dimension_numbers = #tpu.dot_dimension_numbers<[2], [0], [0, 1], [1], [0, 0, 0, 1, 1, 1], [], []>} : vector<72x8x10xbf16>, vector<10x64xbf16>, vector<72x8x64xf32> -> vector<72x8x64xf32>
    %c0_4 = arith.constant 0 : index
    %c0_5 = arith.constant 0 : index
    %c0_6 = arith.constant 0 : index
    %3 = vector.load %arg3[%c0_4, %c0_5, %c0_6] : memref<1x1x64xf32, #tpu.memory_space<vmem>>, vector<1x1x64xf32>
    %4 = vector.broadcast %3 : vector<1x1x64xf32> to vector<72x8x64xf32>
    %5 = arith.mulf %2, %4 : vector<72x8x64xf32>
    %c0_7 = arith.constant 0 : index
    %c0_8 = arith.constant 0 : index
    %c0_9 = arith.constant 0 : index
    %6 = vector.load %arg4[%c0_7, %c0_8, %c0_9] : memref<1x1x64xf32, #tpu.memory_space<vmem>>, vector<1x1x64xf32>
    %7 = vector.broadcast %6 : vector<1x1x64xf32> to vector<72x8x64xf32>
    %8 = arith.addf %5, %7 : vector<72x8x64xf32>
    %cst_10 = arith.constant 0.000000e+00 : f32
    %9 = vector.broadcast %cst_10 : f32 to vector<72x8x64xf32>
    %10 = arith.maximumf %8, %9 : vector<72x8x64xf32>
    %cst_11 = arith.constant dense<0xFF800000> : vector<72x64xf32>
    %11 = vector.multi_reduction <maximumf>, %10, %cst_11 [1] : vector<72x8x64xf32> to vector<72x64xf32>
    %12 = arith.truncf %11 : vector<72x64xf32> to vector<72x64xbf16>
    %c0_12 = arith.constant 0 : index
    %c0_13 = arith.constant 0 : index
    %13 = vector.load %arg5[%c0_12, %c0_13] : memref<72x64xbf16, #tpu.memory_space<vmem>>, vector<72x64xbf16>
    tpu.vector_store %arg5[%c0_12, %c0_13], %12 {strides = array<i32>} : memref<72x64xbf16, #tpu.memory_space<vmem>>, vector<72x64xbf16>,
    return
  }
  func.func @transform_0(%arg0: i32) -> (i32, i32, i32) {
    %c0_i32 = arith.constant 0 : i32
    %c0_i32_0 = arith.constant 0 : i32
    %c0_i32_1 = arith.constant 0 : i32
    return %arg0, %c0_i32, %c0_i32_0 : i32, i32, i32
  }
  func.func @transform_1(%arg0: i32) -> (i32, i32) {
    %c0_i32 = arith.constant 0 : i32
    %c0_i32_0 = arith.constant 0 : i32
    %c0_i32_1 = arith.constant 0 : i32
    return %c0_i32, %c0_i32_0 : i32, i32
  }
  func.func @transform_2(%arg0: i32) -> (i32, i32, i32) {
    %c0_i32 = arith.constant 0 : i32
    %c0_i32_0 = arith.constant 0 : i32
    %c0_i32_1 = arith.constant 0 : i32
    %c0_i32_2 = arith.constant 0 : i32
    return %c0_i32, %c0_i32_0, %c0_i32_1 : i32, i32, i32
  }
  func.func @transform_3(%arg0: i32) -> (i32, i32, i32) {
    %c0_i32 = arith.constant 0 : i32
    %c0_i32_0 = arith.constant 0 : i32
    %c0_i32_1 = arith.constant 0 : i32
    %c0_i32_2 = arith.constant 0 : i32
    return %c0_i32, %c0_i32_0, %c0_i32_1 : i32, i32, i32
  }
  func.func @transform_4(%arg0: i32) -> (i32, i32) {
    %c0_i32 = arith.constant 0 : i32
    %c0_i32_0 = arith.constant 0 : i32
    return %arg0, %c0_i32 : i32, i32
  }
}

</mosaic_0001>

<llo_original>
// kernel: tpu_custom_call.1
$region0: #{tpu_custom_call.1}
  #allocation0 [shape = 'u32[]', space=smem, size = 0x4, offset = 0x4, fixed_abs, tag = 'smem constant byte address 0x4 - core index']
  #allocation1 [shape = 'u32[144,128]{1,0:T(1,128)}', space=vmem, size = 0x12000, scoped, tag = 'internal scratch']
  %s0 = inlined_call_operand.vmem [shape: bf16[72,8,10], index: 0, kind: input, shape index: {}]
  %s1 = inlined_call_operand.vmem [shape: bf16[10,64], index: 1, kind: input, shape index: {}]
  %s2 = inlined_call_operand.vmem [shape: f32[1,1,64], index: 2, kind: input, shape index: {}]
  %s3 = inlined_call_operand.vmem [shape: f32[1,1,64], index: 3, kind: input, shape index: {}]
  %s4 = inlined_call_operand.vmem [shape: bf16[72,64], index: 4, kind: output, shape index: {}]
  %s5 = sld [smem:[#allocation0]]
  $region26: #{tpu_custom_call.1} parent=0
    _
  %s7 = ssub.s32 1, %s5
  %s8 = scalar_select 0, %s7, %s5
  // Predicated region
  $region2: #{tpu_custom_call.1} parent=0 // pred_check
    _
  $region3: #{tpu_custom_call.1} parent=0 // pred_check_branch
    %10 = sbr.rel (0) target = $region5
  $region4: #{tpu_custom_call.1} parent=0 // pred_region
    _
  $region5: #{tpu_custom_call.1} parent=0 // pred_fallthru
    _
  // Predicated region
  $region6: #{tpu_custom_call.1} parent=0 // pred_check
    _
  $region7: #{tpu_custom_call.1} parent=0 // pred_check_branch
    %12 = sbr.rel (0) target = $region9
  $region8: #{tpu_custom_call.1} parent=0 // pred_region
    _
  $region9: #{tpu_custom_call.1} parent=0 // pred_fallthru
    _
  // Predicated region
  $region10: #{tpu_custom_call.1} parent=0 // pred_check
    _
  $region11: #{tpu_custom_call.1} parent=0 // pred_check_branch
    %14 = sbr.rel (0) target = $region13
  $region12: #{tpu_custom_call.1} parent=0 // pred_region
    _
  $region13: #{tpu_custom_call.1} parent=0 // pred_fallthru
    _
  // Predicated region
  $region14: #{tpu_custom_call.1} parent=0 // pred_check
    _
  $region15: #{tpu_custom_call.1} parent=0 // pred_check_branch
    %16 = sbr.rel (0) target = $region17
  $region16: #{tpu_custom_call.1} parent=0 // pred_region
    _
  $region17: #{tpu_custom_call.1} parent=0 // pred_fallthru
    _
  %v18 = vld [vmem:[%s0] sm:$0xf]
  %v19 = vld [vmem:[%s0 + $0x4] sm:$0xf]
  %v20 = vld [vmem:[%s0 + $0x8] sm:$0xf]
  %v21 = vld [vmem:[%s0 + $0xc] sm:$0xf]
  %v22 = vld [vmem:[%s0 + $0x10] sm:$0xf]
  %v23 = vld [vmem:[%s0 + $0x14] sm:$0xf]
  %v24 = vld [vmem:[%s0 + $0x18] sm:$0xf]
  %v25 = vld [vmem:[%s0 + $0x1c] sm:$0xf]
  %v26 = vld [vmem:[%s0 + $0x20] sm:$0xf]
  %v27 = vld [vmem:[%s0 + $0x24] sm:$0xf]
  %v28 = vld [vmem:[%s0 + $0x28] sm:$0xf]
  %v29 = vld [vmem:[%s0 + $0x2c] sm:$0xf]
  %v30 = vld [vmem:[%s0 + $0x30] sm:$0xf]
  %v31 = vld [vmem:[%s0 + $0x34] sm:$0xf]
  %v32 = vld [vmem:[%s0 + $0x38] sm:$0xf]
  %v33 = vld [vmem:[%s0 + $0x3c] sm:$0xf]
  %v34 = vld [vmem:[%s0 + $0x40] sm:$0xf]
  %v35 = vld [vmem:[%s0 + $0x44] sm:$0xf]
  %v36 = vld [vmem:[%s0 + $0x48] sm:$0xf]
  %v37 = vld [vmem:[%s0 + $0x4c] sm:$0xf]
  %v38 = vld [vmem:[%s0 + $0x50] sm:$0xf]
  %v39 = vld [vmem:[%s0 + $0x54] sm:$0xf]
  %v40 = vld [vmem:[%s0 + $0x58] sm:$0xf]
  %v41 = vld [vmem:[%s0 + $0x5c] sm:$0xf]
  %v42 = vld [vmem:[%s0 + $0x60] sm:$0xf]
  %v43 = vld [vmem:[%s0 + $0x64] sm:$0xf]
  %v44 = vld [vmem:[%s0 + $0x68] sm:$0xf]
  %v45 = vld [vmem:[%s0 + $0x6c] sm:$0xf]
  %v46 = vld [vmem:[%s0 + $0x70] sm:$0xf]
  %v47 = vld [vmem:[%s0 + $0x74] sm:$0xf]
  %v48 = vld [vmem:[%s0 + $0x78] sm:$0xf]
  %v49 = vld [vmem:[%s0 + $0x7c] sm:$0xf]
  %v50 = vld [vmem:[%s0 + $0x80] sm:$0xf]
  %v51 = vld [vmem:[%s0 + $0x84] sm:$0xf]
  %v52 = vld [vmem:[%s0 + $0x88] sm:$0xf]
  %v53 = vld [vmem:[%s0 + $0x8c] sm:$0xf]
  %v54 = vld [vmem:[%s0 + $0x90] sm:$0xf]
  %v55 = vld [vmem:[%s0 + $0x94] sm:$0xf]
  %v56 = vld [vmem:[%s0 + $0x98] sm:$0xf]
  %v57 = vld [vmem:[%s0 + $0x9c] sm:$0xf]
  %v58 = vld [vmem:[%s0 + $0xa0] sm:$0xf]
  %v59 = vld [vmem:[%s0 + $0xa4] sm:$0xf]
  %v60 = vld [vmem:[%s0 + $0xa8] sm:$0xf]
  %v61 = vld [vmem:[%s0 + $0xac] sm:$0xf]
  %v62 = vld [vmem:[%s0 + $0xb0] sm:$0xf]
  %v63 = vld [vmem:[%s0 + $0xb4] sm:$0xf]
  %v64 = vld [vmem:[%s0 + $0xb8] sm:$0xf]
  %v65 = vld [vmem:[%s0 + $0xbc] sm:$0xf]
  %v66 = vld [vmem:[%s0 + $0xc0] sm:$0xf]
  %v67 = vld [vmem:[%s0 + $0xc4] sm:$0xf]
  %v68 = vld [vmem:[%s0 + $0xc8] sm:$0xf]
  %v69 = vld [vmem:[%s0 + $0xcc] sm:$0xf]
  %v70 = vld [vmem:[%s0 + $0xd0] sm:$0xf]
  %v71 = vld [vmem:[%s0 + $0xd4] sm:$0xf]
  %v72 = vld [vmem:[%s0 + $0xd8] sm:$0xf]
  %v73 = vld [vmem:[%s0 + $0xdc] sm:$0xf]
  %v74 = vld [vmem:[%s0 + $0xe0] sm:$0xf]
  %v75 = vld [vmem:[%s0 + $0xe4] sm:$0xf]
  %v76 = vld [vmem:[%s0 + $0xe8] sm:$0xf]
  %v77 = vld [vmem:[%s0 + $0xec] sm:$0xf]
  %v78 = vld [vmem:[%s0 + $0xf0] sm:$0xf]
  %v79 = vld [vmem:[%s0 + $0xf4] sm:$0xf]
  %v80 = vld [vmem:[%s0 + $0xf8] sm:$0xf]
  %v81 = vld [vmem:[%s0 + $0xfc] sm:$0xf]
  %v82 = vld [vmem:[%s0 + $0x100] sm:$0xf]
  %v83 = vld [vmem:[%s0 + $0x104] sm:$0xf]
  %v84 = vld [vmem:[%s0 + $0x108] sm:$0xf]
  %v85 = vld [vmem:[%s0 + $0x10c] sm:$0xf]
  %v86 = vld [vmem:[%s0 + $0x110] sm:$0xf]
  %v87 = vld [vmem:[%s0 + $0x114] sm:$0xf]
  %v88 = vld [vmem:[%s0 + $0x118] sm:$0xf]
  %v89 = vld [vmem:[%s0 + $0x11c] sm:$0xf]
  %v90 = vld [vmem:[%s1] sm:$0xf]
  %v91 = vld [vmem:[%s1 + $0x4] sm:$0x1]
  %v164 = vunpack.c.l.b16 %v18
  %v165 = vunpack.c.l.b16 %v19
  %v166 = vunpack.c.l.b16 %v20
  %v167 = vunpack.c.l.b16 %v21
  %v168 = vunpack.c.l.b16 %v22
  %v169 = vunpack.c.l.b16 %v23
  %v170 = vunpack.c.l.b16 %v24
  %v171 = vunpack.c.l.b16 %v25
  %v172 = vunpack.c.l.b16 %v26
  %v173 = vunpack.c.l.b16 %v27
  %v174 = vunpack.c.l.b16 %v28
  %v175 = vunpack.c.l.b16 %v29
  %v176 = vunpack.c.l.b16 %v30
  %v177 = vunpack.c.l.b16 %v31
  %v178 = vunpack.c.l.b16 %v32
  %v179 = vunpack.c.l.b16 %v33
  %v180 = vunpack.c.l.b16 %v34
  %v181 = vunpack.c.l.b16 %v35
  %v182 = vunpack.c.l.b16 %v36
  %v183 = vunpack.c.l.b16 %v37
  %v184 = vunpack.c.l.b16 %v38
  %v185 = vunpack.c.l.b16 %v39
  %v186 = vunpack.c.l.b16 %v40
  %v187 = vunpack.c.l.b16 %v41
  %v188 = vunpack.c.l.b16 %v42
  %v189 = vunpack.c.l.b16 %v43
  %v190 = vunpack.c.l.b16 %v44
  %v191 = vunpack.c.l.b16 %v45
  %v192 = vunpack.c.l.b16 %v46
  %v193 = vunpack.c.l.b16 %v47
  %v194 = vunpack.c.l.b16 %v48
  %v195 = vunpack.c.l.b16 %v49
  %v196 = vunpack.c.l.b16 %v50
  %v197 = vunpack.c.l.b16 %v51
  %v198 = vunpack.c.l.b16 %v52
  %v199 = vunpack.c.l.b16 %v53
  %v200 = vunpack.c.l.b16 %v54
  %v201 = vunpack.c.l.b16 %v55
  %v202 = vunpack.c.l.b16 %v56
  %v203 = vunpack.c.l.b16 %v57
  %v204 = vunpack.c.l.b16 %v58
  %v205 = vunpack.c.l.b16 %v59
  %v206 = vunpack.c.l.b16 %v60
  %v207 = vunpack.c.l.b16 %v61
  %v208 = vunpack.c.l.b16 %v62
  %v209 = vunpack.c.l.b16 %v63
  %v210 = vunpack.c.l.b16 %v64
  %v211 = vunpack.c.l.b16 %v65
  %v212 = vunpack.c.l.b16 %v66
  %v213 = vunpack.c.l.b16 %v67
  %v214 = vunpack.c.l.b16 %v68
  %v215 = vunpack.c.l.b16 %v69
  %v216 = vunpack.c.l.b16 %v70
  %v217 = vunpack.c.l.b16 %v71
  %v218 = vunpack.c.l.b16 %v72
  %v219 = vunpack.c.l.b16 %v73
  %v220 = vunpack.c.l.b16 %v74
  %v221 = vunpack.c.l.b16 %v75
  %v222 = vunpack.c.l.b16 %v76
  %v223 = vunpack.c.l.b16 %v77
  %v224 = vunpack.c.l.b16 %v78
  %v225 = vunpack.c.l.b16 %v79
  %v226 = vunpack.c.l.b16 %v80
  %v227 = vunpack.c.l.b16 %v81
  %v228 = vunpack.c.l.b16 %v82
  %v229 = vunpack.c.l.b16 %v83
  %v230 = vunpack.c.l.b16 %v84
  %v231 = vunpack.c.l.b16 %v85
  %v232 = vunpack.c.l.b16 %v86
  %v233 = vunpack.c.l.b16 %v87
  %v234 = vunpack.c.l.b16 %v88
  %v235 = vunpack.c.l.b16 %v89
  %v236 = vpack.c.b16 %v165, %v164
  %v237 = vpack.c.b16 %v167, %v166
  %v238 = vpack.c.b16 %v169, %v168
  %v239 = vpack.c.b16 %v171, %v170
  %v240 = vpack.c.b16 %v173, %v172
  %v241 = vpack.c.b16 %v175, %v174
  %v242 = vpack.c.b16 %v177, %v176
  %v243 = vpack.c.b16 %v179, %v178
  %v244 = vpack.c.b16 %v181, %v180
  %v245 = vpack.c.b16 %v183, %v182
  %v246 = vpack.c.b16 %v185, %v184
  %v247 = vpack.c.b16 %v187, %v186
  %v248 = vpack.c.b16 %v189, %v188
  %v249 = vpack.c.b16 %v191, %v190
  %v250 = vpack.c.b16 %v193, %v192
  %v251 = vpack.c.b16 %v195, %v194
  %v252 = vpack.c.b16 %v197, %v196
  %v253 = vpack.c.b16 %v199, %v198
  %v254 = vpack.c.b16 %v201, %v200
  %v255 = vpack.c.b16 %v203, %v202
  %v256 = vpack.c.b16 %v205, %v204
  %v257 = vpack.c.b16 %v207, %v206
  %v258 = vpack.c.b16 %v209, %v208
  %v259 = vpack.c.b16 %v211, %v210
  %v260 = vpack.c.b16 %v213, %v212
  %v261 = vpack.c.b16 %v215, %v214
  %v262 = vpack.c.b16 %v217, %v216
  %v263 = vpack.c.b16 %v219, %v218
  %v264 = vpack.c.b16 %v221, %v220
  %v265 = vpack.c.b16 %v223, %v222
  %v266 = vpack.c.b16 %v225, %v224
  %v267 = vpack.c.b16 %v227, %v226
  %v268 = vpack.c.b16 %v229, %v228
  %v269 = vpack.c.b16 %v231, %v230
  %v270 = vpack.c.b16 %v233, %v232
  %v271 = vpack.c.b16 %v235, %v234
  %v274 = vunpack.c.l.b16 %v90
  %v275 = vunpack.c.l.b16 %v91
  %v276 = vpack.c.b16 %v275, %v274
  %vm277 = vcmask 80896
  %v279 = vsel %vm277, %v236, 0
  %v282 = vsel %vm277, %v237, 0
  %v285 = vsel %vm277, %v238, 0
  %v288 = vsel %vm277, %v239, 0
  %v291 = vsel %vm277, %v240, 0
  %v294 = vsel %vm277, %v241, 0
  %v297 = vsel %vm277, %v242, 0
  %v300 = vsel %vm277, %v243, 0
  %v303 = vsel %vm277, %v244, 0
  %v306 = vsel %vm277, %v245, 0
  %v309 = vsel %vm277, %v246, 0
  %v312 = vsel %vm277, %v247, 0
  %v315 = vsel %vm277, %v248, 0
  %v318 = vsel %vm277, %v249, 0
  %v321 = vsel %vm277, %v250, 0
  %v324 = vsel %vm277, %v251, 0
  %v327 = vsel %vm277, %v252, 0
  %v330 = vsel %vm277, %v253, 0
  %v333 = vsel %vm277, %v254, 0
  %v336 = vsel %vm277, %v255, 0
  %v339 = vsel %vm277, %v256, 0
  %v342 = vsel %vm277, %v257, 0
  %v345 = vsel %vm277, %v258, 0
  %v348 = vsel %vm277, %v259, 0
  %v351 = vsel %vm277, %v260, 0
  %v354 = vsel %vm277, %v261, 0
  %v357 = vsel %vm277, %v262, 0
  %v360 = vsel %vm277, %v263, 0
  %v363 = vsel %vm277, %v264, 0
  %v366 = vsel %vm277, %v265, 0
  %v369 = vsel %vm277, %v266, 0
  %v372 = vsel %vm277, %v267, 0
  %v375 = vsel %vm277, %v268, 0
  %v378 = vsel %vm277, %v269, 0
  %v381 = vsel %vm277, %v270, 0
  %v384 = vsel %vm277, %v271, 0
  %vm386 = vcmask 1044480
  %v388 = vsel %vm386, %v276, 0
  %390 = vmatprep.subr.bf16.mxu0 0
  %391 = vmatpush1.bf16.msra.mxu0 %v388
  %392 = vmatprep.subr.bf16.mxu0 0
  %393 = vmatpush1.bf16.msra.mxu0 0
  %394 = vmatprep.subr.bf16.mxu0 0
  %395 = vmatpush1.bf16.msra.mxu0 0
  %396 = vmatprep.subr.bf16.mxu0 0
  %397 = vmatpush1.bf16.msra.mxu0 0
  %398 = vmatprep.subr.bf16.mxu0 0
  %399 = vmatpush1.bf16.msra.mxu0 0
  %400 = vmatprep.subr.bf16.mxu0 0
  %401 = vmatpush1.bf16.msra.mxu0 0
  %402 = vmatprep.subr.bf16.mxu0 0
  %403 = vmatpush1.bf16.msra.mxu0 0
  %404 = vmatprep.subr.bf16.mxu0 0
  %405 = vmatpush1.bf16.msra.mxu0 0
  %406 = vmatprep.subr.bf16.mxu0 0
  %407 = vmatpush1.bf16.msra.mxu0 0
  %408 = vmatprep.subr.bf16.mxu0 0
  %409 = vmatpush1.bf16.msra.mxu0 0
  %410 = vmatprep.subr.bf16.mxu0 0
  %411 = vmatpush1.bf16.msra.mxu0 0
  %412 = vmatprep.subr.bf16.mxu0 0
  %413 = vmatpush1.bf16.msra.mxu0 0
  %414 = vmatprep.subr.bf16.mxu0 0
  %415 = vmatpush1.bf16.msra.mxu0 0
  %416 = vmatprep.subr.bf16.mxu0 0
  %417 = vmatpush1.bf16.msra.mxu0 0
  %418 = vmatprep.subr.bf16.mxu0 0
  %419 = vmatpush1.bf16.msra.mxu0 0
  %420 = vmatprep.subr.bf16.mxu0 0
  %421 = vmatpush1.bf16.msra.mxu0 0
  %422 = vmatprep.mubr.bf16.mxu0 0
  %423 = vmatmul.mubr.bf16.gmra.mrb[0].mxu0 %v279
  %v424 = vpop.f32.mrb[0].mxu0
  %v425 = vadd.f32 0.0, %v424
  %v426 = vpop.f32.mrb[0].mxu0
  %v427 = vpop.f32.mrb[0].mxu0
  %v428 = vadd.f32 0.0, %v427
  %v429 = vpop.f32.mrb[0].mxu0
  %430 = vmatprep.mubr.bf16.mxu0 0
  %431 = vmatmul.mubr.bf16.gmra.mrb[0].mxu0 %v282
  %v432 = vpop.f32.mrb[0].mxu0
  %v433 = vadd.f32 0.0, %v432
  %v434 = vpop.f32.mrb[0].mxu0
  %v435 = vpop.f32.mrb[0].mxu0
  %v436 = vadd.f32 0.0, %v435
  %v437 = vpop.f32.mrb[0].mxu0
  %438 = vmatprep.mubr.bf16.mxu0 0
  %439 = vmatmul.mubr.bf16.gmra.mrb[0].mxu0 %v285
  %v440 = vpop.f32.mrb[0].mxu0
  %v441 = vadd.f32 0.0, %v440
  %v442 = vpop.f32.mrb[0].mxu0
  %v443 = vpop.f32.mrb[0].mxu0
  %v444 = vadd.f32 0.0, %v443
  %v445 = vpop.f32.mrb[0].mxu0
  %446 = vmatprep.mubr.bf16.mxu0 0
  %447 = vmatmul.mubr.bf16.gmra.mrb[0].mxu0 %v288
  %v448 = vpop.f32.mrb[0].mxu0
  %v449 = vadd.f32 0.0, %v448
  %v450 = vpop.f32.mrb[0].mxu0
  %v451 = vpop.f32.mrb[0].mxu0
  %v452 = vadd.f32 0.0, %v451
  %v453 = vpop.f32.mrb[0].mxu0
  %454 = vmatprep.mubr.bf16.mxu0 0
  %455 = vmatmul.mubr.bf16.gmra.mrb[0].mxu0 %v291
  %v456 = vpop.f32.mrb[0].mxu0
  %v457 = vadd.f32 0.0, %v456
  %v458 = vpop.f32.mrb[0].mxu0
  %v459 = vpop.f32.mrb[0].mxu0
  %v460 = vadd.f32 0.0, %v459
  %v461 = vpop.f32.mrb[0].mxu0
  %462 = vmatprep.mubr.bf16.mxu0 0
  %463 = vmatmul.mubr.bf16.gmra.mrb[0].mxu0 %v294
  %v464 = vpop.f32.mrb[0].mxu0
  %v465 = vadd.f32 0.0, %v464
  %v466 = vpop.f32.mrb[0].mxu0
  %v467 = vpop.f32.mrb[0].mxu0
  %v468 = vadd.f32 0.0, %v467
  %v469 = vpop.f32.mrb[0].mxu0
  %470 = vmatprep.mubr.bf16.mxu0 0
  %471 = vmatmul.mubr.bf16.gmra.mrb[0].mxu0 %v297
  %v472 = vpop.f32.mrb[0].mxu0
  %v473 = vadd.f32 0.0, %v472
  %v474 = vpop.f32.mrb[0].mxu0
  %v475 = vpop.f32.mrb[0].mxu0
  %v476 = vadd.f32 0.0, %v475
  %v477 = vpop.f32.mrb[0].mxu0
  %478 = vmatprep.mubr.bf16.mxu0 0
  %479 = vmatmul.mubr.bf16.gmra.mrb[0].mxu0 %v300
  %v480 = vpop.f32.mrb[0].mxu0
  %v481 = vadd.f32 0.0, %v480
  %v482 = vpop.f32.mrb[0].mxu0
  %v483 = vpop.f32.mrb[0].mxu0
  %v484 = vadd.f32 0.0, %v483
  %v485 = vpop.f32.mrb[0].mxu0
  %486 = vmatprep.mubr.bf16.mxu0 0
  %487 = vmatmul.mubr.bf16.gmra.mrb[0].mxu0 %v303
  %v488 = vpop.f32.mrb[0].mxu0
  %v489 = vadd.f32 0.0, %v488
  %v490 = vpop.f32.mrb[0].mxu0
  %v491 = vpop.f32.mrb[0].mxu0
  %v492 = vadd.f32 0.0, %v491
  %v493 = vpop.f32.mrb[0].mxu0
  %494 = vmatprep.mubr.bf16.mxu0 0
  %495 = vmatmul.mubr.bf16.gmra.mrb[0].mxu0 %v306
  %v496 = vpop.f32.mrb[0].mxu0
  %v497 = vadd.f32 0.0, %v496
  %v498 = vpop.f32.mrb[0].mxu0
  %v499 = vpop.f32.mrb[0].mxu0
  %v500 = vadd.f32 0.0, %v499
  %v501 = vpop.f32.mrb[0].mxu0
  %502 = vmatprep.mubr.bf16.mxu0 0
  %503 = vmatmul.mubr.bf16.gmra.mrb[0].mxu0 %v309
  %v504 = vpop.f32.mrb[0].mxu0
  %v505 = vadd.f32 0.0, %v504
  %v506 = vpop.f32.mrb[0].mxu0
  %v507 = vpop.f32.mrb[0].mxu0
  %v508 = vadd.f32 0.0, %v507
  %v509 = vpop.f32.mrb[0].mxu0
  %510 = vmatprep.mubr.bf16.mxu0 0
  %511 = vmatmul.mubr.bf16.gmra.mrb[0].mxu0 %v312
  %v512 = vpop.f32.mrb[0].mxu0
  %v513 = vadd.f32 0.0, %v512
  %v514 = vpop.f32.mrb[0].mxu0
  %v515 = vpop.f32.mrb[0].mxu0
  %v516 = vadd.f32 0.0, %v515
  %v517 = vpop.f32.mrb[0].mxu0
  %518 = vmatprep.mubr.bf16.mxu0 0
  %519 = vmatmul.mubr.bf16.gmra.mrb[0].mxu0 %v315
  %v520 = vpop.f32.mrb[0].mxu0
  %v521 = vadd.f32 0.0, %v520
  %v522 = vpop.f32.mrb[0].mxu0
  %v523 = vpop.f32.mrb[0].mxu0
  %v524 = vadd.f32 0.0, %v523
  %v525 = vpop.f32.mrb[0].mxu0
  %526 = vmatprep.mubr.bf16.mxu0 0
  %527 = vmatmul.mubr.bf16.gmra.mrb[0].mxu0 %v318
  %v528 = vpop.f32.mrb[0].mxu0
  %v529 = vadd.f32 0.0, %v528
  %v530 = vpop.f32.mrb[0].mxu0
  %v531 = vpop.f32.mrb[0].mxu0
  %v532 = vadd.f32 0.0, %v531
  %v533 = vpop.f32.mrb[0].mxu0
  %534 = vmatprep.mubr.bf16.mxu0 0
  %535 = vmatmul.mubr.bf16.gmra.mrb[0].mxu0 %v321
  %v536 = vpop.f32.mrb[0].mxu0
  %v537 = vadd.f32 0.0, %v536
  %v538 = vpop.f32.mrb[0].mxu0
  %v539 = vpop.f32.mrb[0].mxu0
  %v540 = vadd.f32 0.0, %v539
  %v541 = vpop.f32.mrb[0].mxu0
  %542 = vmatprep.mubr.bf16.mxu0 0
  %543 = vmatmul.mubr.bf16.gmra.mrb[0].mxu0 %v324
  %v544 = vpop.f32.mrb[0].mxu0
  %v545 = vadd.f32 0.0, %v544
  %v546 = vpop.f32.mrb[0].mxu0
  %v547 = vpop.f32.mrb[0].mxu0
  %v548 = vadd.f32 0.0, %v547
  %v549 = vpop.f32.mrb[0].mxu0
  %550 = vmatprep.mubr.bf16.mxu0 0
  %551 = vmatmul.mubr.bf16.gmra.mrb[0].mxu0 %v327
  %v552 = vpop.f32.mrb[0].mxu0
  %v553 = vadd.f32 0.0, %v552
  %v554 = vpop.f32.mrb[0].mxu0
  %v555 = vpop.f32.mrb[0].mxu0
  %v556 = vadd.f32 0.0, %v555
  %v557 = vpop.f32.mrb[0].mxu0
  %558 = vmatprep.mubr.bf16.mxu0 0
  %559 = vmatmul.mubr.bf16.gmra.mrb[0].mxu0 %v330
  %v560 = vpop.f32.mrb[0].mxu0
  %v561 = vadd.f32 0.0, %v560
  %v562 = vpop.f32.mrb[0].mxu0
  %v563 = vpop.f32.mrb[0].mxu0
  %v564 = vadd.f32 0.0, %v563
  %v565 = vpop.f32.mrb[0].mxu0
  %566 = vmatprep.mubr.bf16.mxu0 0
  %567 = vmatmul.mubr.bf16.gmra.mrb[0].mxu0 %v333
  %v568 = vpop.f32.mrb[0].mxu0
  %v569 = vadd.f32 0.0, %v568
  %v570 = vpop.f32.mrb[0].mxu0
  %v571 = vpop.f32.mrb[0].mxu0
  %v572 = vadd.f32 0.0, %v571
  %v573 = vpop.f32.mrb[0].mxu0
  %574 = vmatprep.mubr.bf16.mxu0 0
  %575 = vmatmul.mubr.bf16.gmra.mrb[0].mxu0 %v336
  %v576 = vpop.f32.mrb[0].mxu0
  %v577 = vadd.f32 0.0, %v576
  %v578 = vpop.f32.mrb[0].mxu0
  %v579 = vpop.f32.mrb[0].mxu0
  %v580 = vadd.f32 0.0, %v579
  %v581 = vpop.f32.mrb[0].mxu0
  %582 = vmatprep.mubr.bf16.mxu0 0
  %583 = vmatmul.mubr.bf16.gmra.mrb[0].mxu0 %v339
  %v584 = vpop.f32.mrb[0].mxu0
  %v585 = vadd.f32 0.0, %v584
  %v586 = vpop.f32.mrb[0].mxu0
  %v587 = vpop.f32.mrb[0].mxu0
  %v588 = vadd.f32 0.0, %v587
  %v589 = vpop.f32.mrb[0].mxu0
  %590 = vmatprep.mubr.bf16.mxu0 0
  %591 = vmatmul.mubr.bf16.gmra.mrb[0].mxu0 %v342
  %v592 = vpop.f32.mrb[0].mxu0
  %v593 = vadd.f32 0.0, %v592
  %v594 = vpop.f32.mrb[0].mxu0
  %v595 = vpop.f32.mrb[0].mxu0
  %v596 = vadd.f32 0.0, %v595
  %v597 = vpop.f32.mrb[0].mxu0
  %598 = vmatprep.mubr.bf16.mxu0 0
  %599 = vmatmul.mubr.bf16.gmra.mrb[0].mxu0 %v345
  %v600 = vpop.f32.mrb[0].mxu0
  %v601 = vadd.f32 0.0, %v600
  %v602 = vpop.f32.mrb[0].mxu0
  %v603 = vpop.f32.mrb[0].mxu0
  %v604 = vadd.f32 0.0, %v603
  %v605 = vpop.f32.mrb[0].mxu0
  %606 = vmatprep.mubr.bf16.mxu0 0
  %607 = vmatmul.mubr.bf16.gmra.mrb[0].mxu0 %v348
  %v608 = vpop.f32.mrb[0].mxu0
  %v609 = vadd.f32 0.0, %v608
  %v610 = vpop.f32.mrb[0].mxu0
  %v611 = vpop.f32.mrb[0].mxu0
  %v612 = vadd.f32 0.0, %v611
  %v613 = vpop.f32.mrb[0].mxu0
  %614 = vmatprep.mubr.bf16.mxu0 0
  %615 = vmatmul.mubr.bf16.gmra.mrb[0].mxu0 %v351
  %v616 = vpop.f32.mrb[0].mxu0
  %v617 = vadd.f32 0.0, %v616
  %v618 = vpop.f32.mrb[0].mxu0
  %v619 = vpop.f32.mrb[0].mxu0
  %v620 = vadd.f32 0.0, %v619
  %v621 = vpop.f32.mrb[0].mxu0
  %622 = vmatprep.mubr.bf16.mxu0 0
  %623 = vmatmul.mubr.bf16.gmra.mrb[0].mxu0 %v354
  %v624 = vpop.f32.mrb[0].mxu0
  %v625 = vadd.f32 0.0, %v624
  %v626 = vpop.f32.mrb[0].mxu0
  %v627 = vpop.f32.mrb[0].mxu0
  %v628 = vadd.f32 0.0, %v627
  %v629 = vpop.f32.mrb[0].mxu0
  %630 = vmatprep.mubr.bf16.mxu0 0
  %631 = vmatmul.mubr.bf16.gmra.mrb[0].mxu0 %v357
  %v632 = vpop.f32.mrb[0].mxu0
  %v633 = vadd.f32 0.0, %v632
  %v634 = vpop.f32.mrb[0].mxu0
  %v635 = vpop.f32.mrb[0].mxu0
  %v636 = vadd.f32 0.0, %v635
  %v637 = vpop.f32.mrb[0].mxu0
  %638 = vmatprep.mubr.bf16.mxu0 0
  %639 = vmatmul.mubr.bf16.gmra.mrb[0].mxu0 %v360
  %v640 = vpop.f32.mrb[0].mxu0
  %v641 = vadd.f32 0.0, %v640
  %v642 = vpop.f32.mrb[0].mxu0
  %v643 = vpop.f32.mrb[0].mxu0
  %v644 = vadd.f32 0.0, %v643
  %v645 = vpop.f32.mrb[0].mxu0
  %646 = vmatprep.mubr.bf16.mxu0 0
  %647 = vmatmul.mubr.bf16.gmra.mrb[0].mxu0 %v363
  %v648 = vpop.f32.mrb[0].mxu0
  %v649 = vadd.f32 0.0, %v648
  %v650 = vpop.f32.mrb[0].mxu0
  %v651 = vpop.f32.mrb[0].mxu0
  %v652 = vadd.f32 0.0, %v651
  %v653 = vpop.f32.mrb[0].mxu0
  %654 = vmatprep.mubr.bf16.mxu0 0
  %655 = vmatmul.mubr.bf16.gmra.mrb[0].mxu0 %v366
  %v656 = vpop.f32.mrb[0].mxu0
  %v657 = vadd.f32 0.0, %v656
  %v658 = vpop.f32.mrb[0].mxu0
  %v659 = vpop.f32.mrb[0].mxu0
  %v660 = vadd.f32 0.0, %v659
  %v661 = vpop.f32.mrb[0].mxu0
  %662 = vmatprep.mubr.bf16.mxu0 0
  %663 = vmatmul.mubr.bf16.gmra.mrb[0].mxu0 %v369
  %v664 = vpop.f32.mrb[0].mxu0
  %v665 = vadd.f32 0.0, %v664
  %v666 = vpop.f32.mrb[0].mxu0
  %v667 = vpop.f32.mrb[0].mxu0
  %v668 = vadd.f32 0.0, %v667
  %v669 = vpop.f32.mrb[0].mxu0
  %670 = vmatprep.mubr.bf16.mxu0 0
  %671 = vmatmul.mubr.bf16.gmra.mrb[0].mxu0 %v372
  %v672 = vpop.f32.mrb[0].mxu0
  %v673 = vadd.f32 0.0, %v672
  %v674 = vpop.f32.mrb[0].mxu0
  %v675 = vpop.f32.mrb[0].mxu0
  %v676 = vadd.f32 0.0, %v675
  %v677 = vpop.f32.mrb[0].mxu0
  %678 = vmatprep.mubr.bf16.mxu0 0
  %679 = vmatmul.mubr.bf16.gmra.mrb[0].mxu0 %v375
  %v680 = vpop.f32.mrb[0].mxu0
  %v681 = vadd.f32 0.0, %v680
  %v682 = vpop.f32.mrb[0].mxu0
  %v683 = vpop.f32.mrb[0].mxu0
  %v684 = vadd.f32 0.0, %v683
  %v685 = vpop.f32.mrb[0].mxu0
  %686 = vmatprep.mubr.bf16.mxu0 0
  %687 = vmatmul.mubr.bf16.gmra.mrb[0].mxu0 %v378
  %v688 = vpop.f32.mrb[0].mxu0
  %v689 = vadd.f32 0.0, %v688
  %v690 = vpop.f32.mrb[0].mxu0
  %v691 = vpop.f32.mrb[0].mxu0
  %v692 = vadd.f32 0.0, %v691
  %v693 = vpop.f32.mrb[0].mxu0
  %694 = vmatprep.mubr.bf16.mxu0 0
  %695 = vmatmul.mubr.bf16.gmra.mrb[0].mxu0 %v381
  %v696 = vpop.f32.mrb[0].mxu0
  %v697 = vadd.f32 0.0, %v696
  %v698 = vpop.f32.mrb[0].mxu0
  %v699 = vpop.f32.mrb[0].mxu0
  %v700 = vadd.f32 0.0, %v699
  %v701 = vpop.f32.mrb[0].mxu0
  %702 = vmatprep.mubr.bf16.mxu0 0
  %703 = vmatmul.mubr.bf16.gmra.mrb[0].mxu0 %v384
  %v704 = vpop.f32.mrb[0].mxu0
  %v705 = vadd.f32 0.0, %v704
  %v706 = vpop.f32.mrb[0].mxu0
  %v707 = vpop.f32.mrb[0].mxu0
  %v708 = vadd.f32 0.0, %v707
  %v709 = vpop.f32.mrb[0].mxu0
  %710 = vdwg.mxu0
  %v711 = vld [vmem:[%s2] sm:$0x1]
  %v713 = vlaneseq
  %v714 = vshrl.u32 %v713, 7
  %v715 = vsub.s32 0, %v714
  %v716 = vrot.slane %v711, %v715
  %v718 = vmul.f32 %v425, %v716
  %v719 = vmul.f32 %v428, %v716
  %v720 = vmul.f32 %v433, %v716
  %v721 = vmul.f32 %v436, %v716
  %v722 = vmul.f32 %v441, %v716
  %v723 = vmul.f32 %v444, %v716
  %v724 = vmul.f32 %v449, %v716
  %v725 = vmul.f32 %v452, %v716
  %v726 = vmul.f32 %v457, %v716
  %v727 = vmul.f32 %v460, %v716
  %v728 = vmul.f32 %v465, %v716
  %v729 = vmul.f32 %v468, %v716
  %v730 = vmul.f32 %v473, %v716
  %v731 = vmul.f32 %v476, %v716
  %v732 = vmul.f32 %v481, %v716
  %v733 = vmul.f32 %v484, %v716
  %v734 = vmul.f32 %v489, %v716
  %v735 = vmul.f32 %v492, %v716
  %v736 = vmul.f32 %v497, %v716
  %v737 = vmul.f32 %v500, %v716
  %v738 = vmul.f32 %v505, %v716
  %v739 = vmul.f32 %v508, %v716
  %v740 = vmul.f32 %v513, %v716
  %v741 = vmul.f32 %v516, %v716
  %v742 = vmul.f32 %v521, %v716
  %v743 = vmul.f32 %v524, %v716
  %v744 = vmul.f32 %v529, %v716
  %v745 = vmul.f32 %v532, %v716
  %v746 = vmul.f32 %v537, %v716
  %v747 = vmul.f32 %v540, %v716
  %v748 = vmul.f32 %v545, %v716
  %v749 = vmul.f32 %v548, %v716
  %v750 = vmul.f32 %v553, %v716
  %v751 = vmul.f32 %v556, %v716
  %v752 = vmul.f32 %v561, %v716
  %v753 = vmul.f32 %v564, %v716
  %v754 = vmul.f32 %v569, %v716
  %v755 = vmul.f32 %v572, %v716
  %v756 = vmul.f32 %v577, %v716
  %v757 = vmul.f32 %v580, %v716
  %v758 = vmul.f32 %v585, %v716
  %v759 = vmul.f32 %v588, %v716
  %v760 = vmul.f32 %v593, %v716
  %v761 = vmul.f32 %v596, %v716
  %v762 = vmul.f32 %v601, %v716
  %v763 = vmul.f32 %v604, %v716
  %v764 = vmul.f32 %v609, %v716
  %v765 = vmul.f32 %v612, %v716
  %v766 = vmul.f32 %v617, %v716
  %v767 = vmul.f32 %v620, %v716
  %v768 = vmul.f32 %v625, %v716
  %v769 = vmul.f32 %v628, %v716
  %v770 = vmul.f32 %v633, %v716
  %v771 = vmul.f32 %v636, %v716
  %v772 = vmul.f32 %v641, %v716
  %v773 = vmul.f32 %v644, %v716
  %v774 = vmul.f32 %v649, %v716
  %v775 = vmul.f32 %v652, %v716
  %v776 = vmul.f32 %v657, %v716
  %v777 = vmul.f32 %v660, %v716
  %v778 = vmul.f32 %v665, %v716
  %v779 = vmul.f32 %v668, %v716
  %v780 = vmul.f32 %v673, %v716
  %v781 = vmul.f32 %v676, %v716
  %v782 = vmul.f32 %v681, %v716
  %v783 = vmul.f32 %v684, %v716
  %v784 = vmul.f32 %v689, %v716
  %v785 = vmul.f32 %v692, %v716
  %v786 = vmul.f32 %v697, %v716
  %v787 = vmul.f32 %v700, %v716
  %v788 = vmul.f32 %v705, %v716
  %v789 = vmul.f32 %v708, %v716
  %v790 = vld [vmem:[%s3] sm:$0x1]
  %v792 = vlaneseq
  %v793 = vshrl.u32 %v792, 7
  %v794 = vsub.s32 0, %v793
  %v795 = vrot.slane %v790, %v794
  %v797 = vadd.f32 %v718, %v795
  %v798 = vadd.f32 %v719, %v795
  %v799 = vadd.f32 %v720, %v795
  %v800 = vadd.f32 %v721, %v795
  %v801 = vadd.f32 %v722, %v795
  %v802 = vadd.f32 %v723, %v795
  %v803 = vadd.f32 %v724, %v795
  %v804 = vadd.f32 %v725, %v795
  %v805 = vadd.f32 %v726, %v795
  %v806 = vadd.f32 %v727, %v795
  %v807 = vadd.f32 %v728, %v795
  %v808 = vadd.f32 %v729, %v795
  %v809 = vadd.f32 %v730, %v795
  %v810 = vadd.f32 %v731, %v795
  %v811 = vadd.f32 %v732, %v795
  %v812 = vadd.f32 %v733, %v795
  %v813 = vadd.f32 %v734, %v795
  %v814 = vadd.f32 %v735, %v795
  %v815 = vadd.f32 %v736, %v795
  %v816 = vadd.f32 %v737, %v795
  %v817 = vadd.f32 %v738, %v795
  %v818 = vadd.f32 %v739, %v795
  %v819 = vadd.f32 %v740, %v795
  %v820 = vadd.f32 %v741, %v795
  %v821 = vadd.f32 %v742, %v795
  %v822 = vadd.f32 %v743, %v795
  %v823 = vadd.f32 %v744, %v795
  %v824 = vadd.f32 %v745, %v795
  %v825 = vadd.f32 %v746, %v795
  %v826 = vadd.f32 %v747, %v795
  %v827 = vadd.f32 %v748, %v795
  %v828 = vadd.f32 %v749, %v795
  %v829 = vadd.f32 %v750, %v795
  %v830 = vadd.f32 %v751, %v795
  %v831 = vadd.f32 %v752, %v795
  %v832 = vadd.f32 %v753, %v795
  %v833 = vadd.f32 %v754, %v795
  %v834 = vadd.f32 %v755, %v795
  %v835 = vadd.f32 %v756, %v795
  %v836 = vadd.f32 %v757, %v795
  %v837 = vadd.f32 %v758, %v795
  %v838 = vadd.f32 %v759, %v795
  %v839 = vadd.f32 %v760, %v795
  %v840 = vadd.f32 %v761, %v795
  %v841 = vadd.f32 %v762, %v795
  %v842 = vadd.f32 %v763, %v795
  %v843 = vadd.f32 %v764, %v795
  %v844 = vadd.f32 %v765, %v795
  %v845 = vadd.f32 %v766, %v795
  %v846 = vadd.f32 %v767, %v795
  %v847 = vadd.f32 %v768, %v795
  %v848 = vadd.f32 %v769, %v795
  %v849 = vadd.f32 %v770, %v795
  %v850 = vadd.f32 %v771, %v795
  %v851 = vadd.f32 %v772, %v795
  %v852 = vadd.f32 %v773, %v795
  %v853 = vadd.f32 %v774, %v795
  %v854 = vadd.f32 %v775, %v795
  %v855 = vadd.f32 %v776, %v795
  %v856 = vadd.f32 %v777, %v795
  %v857 = vadd.f32 %v778, %v795
  %v858 = vadd.f32 %v779, %v795
  %v859 = vadd.f32 %v780, %v795
  %v860 = vadd.f32 %v781, %v795
  %v861 = vadd.f32 %v782, %v795
  %v862 = vadd.f32 %v783, %v795
  %v863 = vadd.f32 %v784, %v795
  %v864 = vadd.f32 %v785, %v795
  %v865 = vadd.f32 %v786, %v795
  %v866 = vadd.f32 %v787, %v795
  %v867 = vadd.f32 %v788, %v795
  %v868 = vadd.f32 %v789, %v795
  %v869 = vmax.f32 %v797, 0.0
  %v870 = vmax.f32 %v798, 0.0
  %v871 = vmax.f32 %v799, 0.0
  %v872 = vmax.f32 %v800, 0.0
  %v873 = vmax.f32 %v801, 0.0
  %v874 = vmax.f32 %v802, 0.0
  %v875 = vmax.f32 %v803, 0.0
  %v876 = vmax.f32 %v804, 0.0
  %v877 = vmax.f32 %v805, 0.0
  %v878 = vmax.f32 %v806, 0.0
  %v879 = vmax.f32 %v807, 0.0
  %v880 = vmax.f32 %v808, 0.0
  %v881 = vmax.f32 %v809, 0.0
  %v882 = vmax.f32 %v810, 0.0
  %v883 = vmax.f32 %v811, 0.0
  %v884 = vmax.f32 %v812, 0.0
  %v885 = vmax.f32 %v813, 0.0
  %v886 = vmax.f32 %v814, 0.0
  %v887 = vmax.f32 %v815, 0.0
  %v888 = vmax.f32 %v816, 0.0
  %v889 = vmax.f32 %v817, 0.0
  %v890 = vmax.f32 %v818, 0.0
  %v891 = vmax.f32 %v819, 0.0
  %v892 = vmax.f32 %v820, 0.0
  %v893 = vmax.f32 %v821, 0.0
  %v894 = vmax.f32 %v822, 0.0
  %v895 = vmax.f32 %v823, 0.0
  %v896 = vmax.f32 %v824, 0.0
  %v897 = vmax.f32 %v825, 0.0
  %v898 = vmax.f32 %v826, 0.0
  %v899 = vmax.f32 %v827, 0.0
  %v900 = vmax.f32 %v828, 0.0
  %v901 = vmax.f32 %v829, 0.0
  %v902 = vmax.f32 %v830, 0.0
  %v903 = vmax.f32 %v831, 0.0
  %v904 = vmax.f32 %v832, 0.0
  %v905 = vmax.f32 %v833, 0.0
  %v906 = vmax.f32 %v834, 0.0
  %v907 = vmax.f32 %v835, 0.0
  %v908 = vmax.f32 %v836, 0.0
  %v909 = vmax.f32 %v837, 0.0
  %v910 = vmax.f32 %v838, 0.0
  %v911 = vmax.f32 %v839, 0.0
  %v912 = vmax.f32 %v840, 0.0
  %v913 = vmax.f32 %v841, 0.0
  %v914 = vmax.f32 %v842, 0.0
  %v915 = vmax.f32 %v843, 0.0
  %v916 = vmax.f32 %v844, 0.0
  %v917 = vmax.f32 %v845, 0.0
  %v918 = vmax.f32 %v846, 0.0
  %v919 = vmax.f32 %v847, 0.0
  %v920 = vmax.f32 %v848, 0.0
  %v921 = vmax.f32 %v849, 0.0
  %v922 = vmax.f32 %v850, 0.0
  %v923 = vmax.f32 %v851, 0.0
  %v924 = vmax.f32 %v852, 0.0
  %v925 = vmax.f32 %v853, 0.0
  %v926 = vmax.f32 %v854, 0.0
  %v927 = vmax.f32 %v855, 0.0
  %v928 = vmax.f32 %v856, 0.0
  %v929 = vmax.f32 %v857, 0.0
  %v930 = vmax.f32 %v858, 0.0
  %v931 = vmax.f32 %v859, 0.0
  %v932 = vmax.f32 %v860, 0.0
  %v933 = vmax.f32 %v861, 0.0
  %v934 = vmax.f32 %v862, 0.0
  %v935 = vmax.f32 %v863, 0.0
  %v936 = vmax.f32 %v864, 0.0
  %v937 = vmax.f32 %v865, 0.0
  %v938 = vmax.f32 %v866, 0.0
  %v939 = vmax.f32 %v867, 0.0
  %v940 = vmax.f32 %v868, 0.0
  %vm941 = vcmask 523264
  %v942 = vsel %vm941, %v869, -inf
  %v943 = vrot.slane %v942, 4
  %v944 = vmax.f32 %v942, %v943
  %v945 = vrot.slane %v944, 2
  %v946 = vmax.f32 %v944, %v945
  %v947 = vrot.slane %v946, 1
  %v948 = vmax.f32 %v946, %v947
  %v949 = vsel %vm941, %v870, -inf
  %v950 = vrot.slane %v949, 4
  %v951 = vmax.f32 %v949, %v950
  %v952 = vrot.slane %v951, 2
  %v953 = vmax.f32 %v951, %v952
  %v954 = vrot.slane %v953, 1
  %v955 = vmax.f32 %v953, %v954
  %v956 = vsel %vm941, %v871, -inf
  %v957 = vrot.slane %v956, 4
  %v958 = vmax.f32 %v956, %v957
  %v959 = vrot.slane %v958, 2
  %v960 = vmax.f32 %v958, %v959
  %v961 = vrot.slane %v960, 1
  %v962 = vmax.f32 %v960, %v961
  %v963 = vsel %vm941, %v872, -inf
  %v964 = vrot.slane %v963, 4
  %v965 = vmax.f32 %v963, %v964
  %v966 = vrot.slane %v965, 2
  %v967 = vmax.f32 %v965, %v966
  %v968 = vrot.slane %v967, 1
  %v969 = vmax.f32 %v967, %v968
  %v970 = vsel %vm941, %v873, -inf
  %v971 = vrot.slane %v970, 4
  %v972 = vmax.f32 %v970, %v971
  %v973 = vrot.slane %v972, 2
  %v974 = vmax.f32 %v972, %v973
  %v975 = vrot.slane %v974, 1
  %v976 = vmax.f32 %v974, %v975
  %v977 = vsel %vm941, %v874, -inf
  %v978 = vrot.slane %v977, 4
  %v979 = vmax.f32 %v977, %v978
  %v980 = vrot.slane %v979, 2
  %v981 = vmax.f32 %v979, %v980
  %v982 = vrot.slane %v981, 1
  %v983 = vmax.f32 %v981, %v982
  %v984 = vsel %vm941, %v875, -inf
  %v985 = vrot.slane %v984, 4
  %v986 = vmax.f32 %v984, %v985
  %v987 = vrot.slane %v986, 2
  %v988 = vmax.f32 %v986, %v987
  %v989 = vrot.slane %v988, 1
  %v990 = vmax.f32 %v988, %v989
  %v991 = vsel %vm941, %v876, -inf
  %v992 = vrot.slane %v991, 4
  %v993 = vmax.f32 %v991, %v992
  %v994 = vrot.slane %v993, 2
  %v995 = vmax.f32 %v993, %v994
  %v996 = vrot.slane %v995, 1
  %v997 = vmax.f32 %v995, %v996
  %v998 = vsel %vm941, %v877, -inf
  %v999 = vrot.slane %v998, 4
  %v1000 = vmax.f32 %v998, %v999
  %v1001 = vrot.slane %v1000, 2
  %v1002 = vmax.f32 %v1000, %v1001
  %v1003 = vrot.slane %v1002, 1
  %v1004 = vmax.f32 %v1002, %v1003
  %v1005 = vsel %vm941, %v878, -inf
  %v1006 = vrot.slane %v1005, 4
  %v1007 = vmax.f32 %v1005, %v1006
  %v1008 = vrot.slane %v1007, 2
  %v1009 = vmax.f32 %v1007, %v1008
  %v1010 = vrot.slane %v1009, 1
  %v1011 = vmax.f32 %v1009, %v1010
  %v1012 = vsel %vm941, %v879, -inf
  %v1013 = vrot.slane %v1012, 4
  %v1014 = vmax.f32 %v1012, %v1013
  %v1015 = vrot.slane %v1014, 2
  %v1016 = vmax.f32 %v1014, %v1015
  %v1017 = vrot.slane %v1016, 1
  %v1018 = vmax.f32 %v1016, %v1017
  %v1019 = vsel %vm941, %v880, -inf
  %v1020 = vrot.slane %v1019, 4
  %v1021 = vmax.f32 %v1019, %v1020
  %v1022 = vrot.slane %v1021, 2
  %v1023 = vmax.f32 %v1021, %v1022
  %v1024 = vrot.slane %v1023, 1
  %v1025 = vmax.f32 %v1023, %v1024
  %v1026 = vsel %vm941, %v881, -inf
  %v1027 = vrot.slane %v1026, 4
  %v1028 = vmax.f32 %v1026, %v1027
  %v1029 = vrot.slane %v1028, 2
  %v1030 = vmax.f32 %v1028, %v1029
  %v1031 = vrot.slane %v1030, 1
  %v1032 = vmax.f32 %v1030, %v1031
  %v1033 = vsel %vm941, %v882, -inf
  %v1034 = vrot.slane %v1033, 4
  %v1035 = vmax.f32 %v1033, %v1034
  %v1036 = vrot.slane %v1035, 2
  %v1037 = vmax.f32 %v1035, %v1036
  %v1038 = vrot.slane %v1037, 1
  %v1039 = vmax.f32 %v1037, %v1038
  %v1040 = vsel %vm941, %v883, -inf
  %v1041 = vrot.slane %v1040, 4
  %v1042 = vmax.f32 %v1040, %v1041
  %v1043 = vrot.slane %v1042, 2
  %v1044 = vmax.f32 %v1042, %v1043
  %v1045 = vrot.slane %v1044, 1
  %v1046 = vmax.f32 %v1044, %v1045
  %v1047 = vsel %vm941, %v884, -inf
  %v1048 = vrot.slane %v1047, 4
  %v1049 = vmax.f32 %v1047, %v1048
  %v1050 = vrot.slane %v1049, 2
  %v1051 = vmax.f32 %v1049, %v1050
  %v1052 = vrot.slane %v1051, 1
  %v1053 = vmax.f32 %v1051, %v1052
  %v1054 = vsel %vm941, %v885, -inf
  %v1055 = vrot.slane %v1054, 4
  %v1056 = vmax.f32 %v1054, %v1055
  %v1057 = vrot.slane %v1056, 2
  %v1058 = vmax.f32 %v1056, %v1057
  %v1059 = vrot.slane %v1058, 1
  %v1060 = vmax.f32 %v1058, %v1059
  %v1061 = vsel %vm941, %v886, -inf
  %v1062 = vrot.slane %v1061, 4
  %v1063 = vmax.f32 %v1061, %v1062
  %v1064 = vrot.slane %v1063, 2
  %v1065 = vmax.f32 %v1063, %v1064
  %v1066 = vrot.slane %v1065, 1
  %v1067 = vmax.f32 %v1065, %v1066
  %v1068 = vsel %vm941, %v887, -inf
  %v1069 = vrot.slane %v1068, 4
  %v1070 = vmax.f32 %v1068, %v1069
  %v1071 = vrot.slane %v1070, 2
  %v1072 = vmax.f32 %v1070, %v1071
  %v1073 = vrot.slane %v1072, 1
  %v1074 = vmax.f32 %v1072, %v1073
  %v1075 = vsel %vm941, %v888, -inf
  %v1076 = vrot.slane %v1075, 4
  %v1077 = vmax.f32 %v1075, %v1076
  %v1078 = vrot.slane %v1077, 2
  %v1079 = vmax.f32 %v1077, %v1078
  %v1080 = vrot.slane %v1079, 1
  %v1081 = vmax.f32 %v1079, %v1080
  %v1082 = vsel %vm941, %v889, -inf
  %v1083 = vrot.slane %v1082, 4
  %v1084 = vmax.f32 %v1082, %v1083
  %v1085 = vrot.slane %v1084, 2
  %v1086 = vmax.f32 %v1084, %v1085
  %v1087 = vrot.slane %v1086, 1
  %v1088 = vmax.f32 %v1086, %v1087
  %v1089 = vsel %vm941, %v890, -inf
  %v1090 = vrot.slane %v1089, 4
  %v1091 = vmax.f32 %v1089, %v1090
  %v1092 = vrot.slane %v1091, 2
  %v1093 = vmax.f32 %v1091, %v1092
  %v1094 = vrot.slane %v1093, 1
  %v1095 = vmax.f32 %v1093, %v1094
  %v1096 = vsel %vm941, %v891, -inf
  %v1097 = vrot.slane %v1096, 4
  %v1098 = vmax.f32 %v1096, %v1097
  %v1099 = vrot.slane %v1098, 2
  %v1100 = vmax.f32 %v1098, %v1099
  %v1101 = vrot.slane %v1100, 1
  %v1102 = vmax.f32 %v1100, %v1101
  %v1103 = vsel %vm941, %v892, -inf
  %v1104 = vrot.slane %v1103, 4
  %v1105 = vmax.f32 %v1103, %v1104
  %v1106 = vrot.slane %v1105, 2
  %v1107 = vmax.f32 %v1105, %v1106
  %v1108 = vrot.slane %v1107, 1
  %v1109 = vmax.f32 %v1107, %v1108
  %v1110 = vsel %vm941, %v893, -inf
  %v1111 = vrot.slane %v1110, 4
  %v1112 = vmax.f32 %v1110, %v1111
  %v1113 = vrot.slane %v1112, 2
  %v1114 = vmax.f32 %v1112, %v1113
  %v1115 = vrot.slane %v1114, 1
  %v1116 = vmax.f32 %v1114, %v1115
  %v1117 = vsel %vm941, %v894, -inf
  %v1118 = vrot.slane %v1117, 4
  %v1119 = vmax.f32 %v1117, %v1118
  %v1120 = vrot.slane %v1119, 2
  %v1121 = vmax.f32 %v1119, %v1120
  %v1122 = vrot.slane %v1121, 1
  %v1123 = vmax.f32 %v1121, %v1122
  %v1124 = vsel %vm941, %v895, -inf
  %v1125 = vrot.slane %v1124, 4
  %v1126 = vmax.f32 %v1124, %v1125
  %v1127 = vrot.slane %v1126, 2
  %v1128 = vmax.f32 %v1126, %v1127
  %v1129 = vrot.slane %v1128, 1
  %v1130 = vmax.f32 %v1128, %v1129
  %v1131 = vsel %vm941, %v896, -inf
  %v1132 = vrot.slane %v1131, 4
  %v1133 = vmax.f32 %v1131, %v1132
  %v1134 = vrot.slane %v1133, 2
  %v1135 = vmax.f32 %v1133, %v1134
  %v1136 = vrot.slane %v1135, 1
  %v1137 = vmax.f32 %v1135, %v1136
  %v1138 = vsel %vm941, %v897, -inf
  %v1139 = vrot.slane %v1138, 4
  %v1140 = vmax.f32 %v1138, %v1139
  %v1141 = vrot.slane %v1140, 2
  %v1142 = vmax.f32 %v1140, %v1141
  %v1143 = vrot.slane %v1142, 1
  %v1144 = vmax.f32 %v1142, %v1143
  %v1145 = vsel %vm941, %v898, -inf
  %v1146 = vrot.slane %v1145, 4
  %v1147 = vmax.f32 %v1145, %v1146
  %v1148 = vrot.slane %v1147, 2
  %v1149 = vmax.f32 %v1147, %v1148
  %v1150 = vrot.slane %v1149, 1
  %v1151 = vmax.f32 %v1149, %v1150
  %v1152 = vsel %vm941, %v899, -inf
  %v1153 = vrot.slane %v1152, 4
  %v1154 = vmax.f32 %v1152, %v1153
  %v1155 = vrot.slane %v1154, 2
  %v1156 = vmax.f32 %v1154, %v1155
  %v1157 = vrot.slane %v1156, 1
  %v1158 = vmax.f32 %v1156, %v1157
  %v1159 = vsel %vm941, %v900, -inf
  %v1160 = vrot.slane %v1159, 4
  %v1161 = vmax.f32 %v1159, %v1160
  %v1162 = vrot.slane %v1161, 2
  %v1163 = vmax.f32 %v1161, %v1162
  %v1164 = vrot.slane %v1163, 1
  %v1165 = vmax.f32 %v1163, %v1164
  %v1166 = vsel %vm941, %v901, -inf
  %v1167 = vrot.slane %v1166, 4
  %v1168 = vmax.f32 %v1166, %v1167
  %v1169 = vrot.slane %v1168, 2
  %v1170 = vmax.f32 %v1168, %v1169
  %v1171 = vrot.slane %v1170, 1
  %v1172 = vmax.f32 %v1170, %v1171
  %v1173 = vsel %vm941, %v902, -inf
  %v1174 = vrot.slane %v1173, 4
  %v1175 = vmax.f32 %v1173, %v1174
  %v1176 = vrot.slane %v1175, 2
  %v1177 = vmax.f32 %v1175, %v1176
  %v1178 = vrot.slane %v1177, 1
  %v1179 = vmax.f32 %v1177, %v1178
  %v1180 = vsel %vm941, %v903, -inf
  %v1181 = vrot.slane %v1180, 4
  %v1182 = vmax.f32 %v1180, %v1181
  %v1183 = vrot.slane %v1182, 2
  %v1184 = vmax.f32 %v1182, %v1183
  %v1185 = vrot.slane %v1184, 1
  %v1186 = vmax.f32 %v1184, %v1185
  %v1187 = vsel %vm941, %v904, -inf
  %v1188 = vrot.slane %v1187, 4
  %v1189 = vmax.f32 %v1187, %v1188
  %v1190 = vrot.slane %v1189, 2
  %v1191 = vmax.f32 %v1189, %v1190
  %v1192 = vrot.slane %v1191, 1
  %v1193 = vmax.f32 %v1191, %v1192
  %v1194 = vsel %vm941, %v905, -inf
  %v1195 = vrot.slane %v1194, 4
  %v1196 = vmax.f32 %v1194, %v1195
  %v1197 = vrot.slane %v1196, 2
  %v1198 = vmax.f32 %v1196, %v1197
  %v1199 = vrot.slane %v1198, 1
  %v1200 = vmax.f32 %v1198, %v1199
  %v1201 = vsel %vm941, %v906, -inf
  %v1202 = vrot.slane %v1201, 4
  %v1203 = vmax.f32 %v1201, %v1202
  %v1204 = vrot.slane %v1203, 2
  %v1205 = vmax.f32 %v1203, %v1204
  %v1206 = vrot.slane %v1205, 1
  %v1207 = vmax.f32 %v1205, %v1206
  %v1208 = vsel %vm941, %v907, -inf
  %v1209 = vrot.slane %v1208, 4
  %v1210 = vmax.f32 %v1208, %v1209
  %v1211 = vrot.slane %v1210, 2
  %v1212 = vmax.f32 %v1210, %v1211
  %v1213 = vrot.slane %v1212, 1
  %v1214 = vmax.f32 %v1212, %v1213
  %v1215 = vsel %vm941, %v908, -inf
  %v1216 = vrot.slane %v1215, 4
  %v1217 = vmax.f32 %v1215, %v1216
  %v1218 = vrot.slane %v1217, 2
  %v1219 = vmax.f32 %v1217, %v1218
  %v1220 = vrot.slane %v1219, 1
  %v1221 = vmax.f32 %v1219, %v1220
  %v1222 = vsel %vm941, %v909, -inf
  %v1223 = vrot.slane %v1222, 4
  %v1224 = vmax.f32 %v1222, %v1223
  %v1225 = vrot.slane %v1224, 2
  %v1226 = vmax.f32 %v1224, %v1225
  %v1227 = vrot.slane %v1226, 1
  %v1228 = vmax.f32 %v1226, %v1227
  %v1229 = vsel %vm941, %v910, -inf
  %v1230 = vrot.slane %v1229, 4
  %v1231 = vmax.f32 %v1229, %v1230
  %v1232 = vrot.slane %v1231, 2
  %v1233 = vmax.f32 %v1231, %v1232
  %v1234 = vrot.slane %v1233, 1
  %v1235 = vmax.f32 %v1233, %v1234
  %v1236 = vsel %vm941, %v911, -inf
  %v1237 = vrot.slane %v1236, 4
  %v1238 = vmax.f32 %v1236, %v1237
  %v1239 = vrot.slane %v1238, 2
  %v1240 = vmax.f32 %v1238, %v1239
  %v1241 = vrot.slane %v1240, 1
  %v1242 = vmax.f32 %v1240, %v1241
  %v1243 = vsel %vm941, %v912, -inf
  %v1244 = vrot.slane %v1243, 4
  %v1245 = vmax.f32 %v1243, %v1244
  %v1246 = vrot.slane %v1245, 2
  %v1247 = vmax.f32 %v1245, %v1246
  %v1248 = vrot.slane %v1247, 1
  %v1249 = vmax.f32 %v1247, %v1248
  %v1250 = vsel %vm941, %v913, -inf
  %v1251 = vrot.slane %v1250, 4
  %v1252 = vmax.f32 %v1250, %v1251
  %v1253 = vrot.slane %v1252, 2
  %v1254 = vmax.f32 %v1252, %v1253
  %v1255 = vrot.slane %v1254, 1
  %v1256 = vmax.f32 %v1254, %v1255
  %v1257 = vsel %vm941, %v914, -inf
  %v1258 = vrot.slane %v1257, 4
  %v1259 = vmax.f32 %v1257, %v1258
  %v1260 = vrot.slane %v1259, 2
  %v1261 = vmax.f32 %v1259, %v1260
  %v1262 = vrot.slane %v1261, 1
  %v1263 = vmax.f32 %v1261, %v1262
  %v1264 = vsel %vm941, %v915, -inf
  %v1265 = vrot.slane %v1264, 4
  %v1266 = vmax.f32 %v1264, %v1265
  %v1267 = vrot.slane %v1266, 2
  %v1268 = vmax.f32 %v1266, %v1267
  %v1269 = vrot.slane %v1268, 1
  %v1270 = vmax.f32 %v1268, %v1269
  %v1271 = vsel %vm941, %v916, -inf
  %v1272 = vrot.slane %v1271, 4
  %v1273 = vmax.f32 %v1271, %v1272
  %v1274 = vrot.slane %v1273, 2
  %v1275 = vmax.f32 %v1273, %v1274
  %v1276 = vrot.slane %v1275, 1
  %v1277 = vmax.f32 %v1275, %v1276
  %v1278 = vsel %vm941, %v917, -inf
  %v1279 = vrot.slane %v1278, 4
  %v1280 = vmax.f32 %v1278, %v1279
  %v1281 = vrot.slane %v1280, 2
  %v1282 = vmax.f32 %v1280, %v1281
  %v1283 = vrot.slane %v1282, 1
  %v1284 = vmax.f32 %v1282, %v1283
  %v1285 = vsel %vm941, %v918, -inf
  %v1286 = vrot.slane %v1285, 4
  %v1287 = vmax.f32 %v1285, %v1286
  %v1288 = vrot.slane %v1287, 2
  %v1289 = vmax.f32 %v1287, %v1288
  %v1290 = vrot.slane %v1289, 1
  %v1291 = vmax.f32 %v1289, %v1290
  %v1292 = vsel %vm941, %v919, -inf
  %v1293 = vrot.slane %v1292, 4
  %v1294 = vmax.f32 %v1292, %v1293
  %v1295 = vrot.slane %v1294, 2
  %v1296 = vmax.f32 %v1294, %v1295
  %v1297 = vrot.slane %v1296, 1
  %v1298 = vmax.f32 %v1296, %v1297
  %v1299 = vsel %vm941, %v920, -inf
  %v1300 = vrot.slane %v1299, 4
  %v1301 = vmax.f32 %v1299, %v1300
  %v1302 = vrot.slane %v1301, 2
  %v1303 = vmax.f32 %v1301, %v1302
  %v1304 = vrot.slane %v1303, 1
  %v1305 = vmax.f32 %v1303, %v1304
  %v1306 = vsel %vm941, %v921, -inf
  %v1307 = vrot.slane %v1306, 4
  %v1308 = vmax.f32 %v1306, %v1307
  %v1309 = vrot.slane %v1308, 2
  %v1310 = vmax.f32 %v1308, %v1309
  %v1311 = vrot.slane %v1310, 1
  %v1312 = vmax.f32 %v1310, %v1311
  %v1313 = vsel %vm941, %v922, -inf
  %v1314 = vrot.slane %v1313, 4
  %v1315 = vmax.f32 %v1313, %v1314
  %v1316 = vrot.slane %v1315, 2
  %v1317 = vmax.f32 %v1315, %v1316
  %v1318 = vrot.slane %v1317, 1
  %v1319 = vmax.f32 %v1317, %v1318
  %v1320 = vsel %vm941, %v923, -inf
  %v1321 = vrot.slane %v1320, 4
  %v1322 = vmax.f32 %v1320, %v1321
  %v1323 = vrot.slane %v1322, 2
  %v1324 = vmax.f32 %v1322, %v1323
  %v1325 = vrot.slane %v1324, 1
  %v1326 = vmax.f32 %v1324, %v1325
  %v1327 = vsel %vm941, %v924, -inf
  %v1328 = vrot.slane %v1327, 4
  %v1329 = vmax.f32 %v1327, %v1328
  %v1330 = vrot.slane %v1329, 2
  %v1331 = vmax.f32 %v1329, %v1330
  %v1332 = vrot.slane %v1331, 1
  %v1333 = vmax.f32 %v1331, %v1332
  %v1334 = vsel %vm941, %v925, -inf
  %v1335 = vrot.slane %v1334, 4
  %v1336 = vmax.f32 %v1334, %v1335
  %v1337 = vrot.slane %v1336, 2
  %v1338 = vmax.f32 %v1336, %v1337
  %v1339 = vrot.slane %v1338, 1
  %v1340 = vmax.f32 %v1338, %v1339
  %v1341 = vsel %vm941, %v926, -inf
  %v1342 = vrot.slane %v1341, 4
  %v1343 = vmax.f32 %v1341, %v1342
  %v1344 = vrot.slane %v1343, 2
  %v1345 = vmax.f32 %v1343, %v1344
  %v1346 = vrot.slane %v1345, 1
  %v1347 = vmax.f32 %v1345, %v1346
  %v1348 = vsel %vm941, %v927, -inf
  %v1349 = vrot.slane %v1348, 4
  %v1350 = vmax.f32 %v1348, %v1349
  %v1351 = vrot.slane %v1350, 2
  %v1352 = vmax.f32 %v1350, %v1351
  %v1353 = vrot.slane %v1352, 1
  %v1354 = vmax.f32 %v1352, %v1353
  %v1355 = vsel %vm941, %v928, -inf
  %v1356 = vrot.slane %v1355, 4
  %v1357 = vmax.f32 %v1355, %v1356
  %v1358 = vrot.slane %v1357, 2
  %v1359 = vmax.f32 %v1357, %v1358
  %v1360 = vrot.slane %v1359, 1
  %v1361 = vmax.f32 %v1359, %v1360
  %v1362 = vsel %vm941, %v929, -inf
  %v1363 = vrot.slane %v1362, 4
  %v1364 = vmax.f32 %v1362, %v1363
  %v1365 = vrot.slane %v1364, 2
  %v1366 = vmax.f32 %v1364, %v1365
  %v1367 = vrot.slane %v1366, 1
  %v1368 = vmax.f32 %v1366, %v1367
  %v1369 = vsel %vm941, %v930, -inf
  %v1370 = vrot.slane %v1369, 4
  %v1371 = vmax.f32 %v1369, %v1370
  %v1372 = vrot.slane %v1371, 2
  %v1373 = vmax.f32 %v1371, %v1372
  %v1374 = vrot.slane %v1373, 1
  %v1375 = vmax.f32 %v1373, %v1374
  %v1376 = vsel %vm941, %v931, -inf
  %v1377 = vrot.slane %v1376, 4
  %v1378 = vmax.f32 %v1376, %v1377
  %v1379 = vrot.slane %v1378, 2
  %v1380 = vmax.f32 %v1378, %v1379
  %v1381 = vrot.slane %v1380, 1
  %v1382 = vmax.f32 %v1380, %v1381
  %v1383 = vsel %vm941, %v932, -inf
  %v1384 = vrot.slane %v1383, 4
  %v1385 = vmax.f32 %v1383, %v1384
  %v1386 = vrot.slane %v1385, 2
  %v1387 = vmax.f32 %v1385, %v1386
  %v1388 = vrot.slane %v1387, 1
  %v1389 = vmax.f32 %v1387, %v1388
  %v1390 = vsel %vm941, %v933, -inf
  %v1391 = vrot.slane %v1390, 4
  %v1392 = vmax.f32 %v1390, %v1391
  %v1393 = vrot.slane %v1392, 2
  %v1394 = vmax.f32 %v1392, %v1393
  %v1395 = vrot.slane %v1394, 1
  %v1396 = vmax.f32 %v1394, %v1395
  %v1397 = vsel %vm941, %v934, -inf
  %v1398 = vrot.slane %v1397, 4
  %v1399 = vmax.f32 %v1397, %v1398
  %v1400 = vrot.slane %v1399, 2
  %v1401 = vmax.f32 %v1399, %v1400
  %v1402 = vrot.slane %v1401, 1
  %v1403 = vmax.f32 %v1401, %v1402
  %v1404 = vsel %vm941, %v935, -inf
  %v1405 = vrot.slane %v1404, 4
  %v1406 = vmax.f32 %v1404, %v1405
  %v1407 = vrot.slane %v1406, 2
  %v1408 = vmax.f32 %v1406, %v1407
  %v1409 = vrot.slane %v1408, 1
  %v1410 = vmax.f32 %v1408, %v1409
  %v1411 = vsel %vm941, %v936, -inf
  %v1412 = vrot.slane %v1411, 4
  %v1413 = vmax.f32 %v1411, %v1412
  %v1414 = vrot.slane %v1413, 2
  %v1415 = vmax.f32 %v1413, %v1414
  %v1416 = vrot.slane %v1415, 1
  %v1417 = vmax.f32 %v1415, %v1416
  %v1418 = vsel %vm941, %v937, -inf
  %v1419 = vrot.slane %v1418, 4
  %v1420 = vmax.f32 %v1418, %v1419
  %v1421 = vrot.slane %v1420, 2
  %v1422 = vmax.f32 %v1420, %v1421
  %v1423 = vrot.slane %v1422, 1
  %v1424 = vmax.f32 %v1422, %v1423
  %v1425 = vsel %vm941, %v938, -inf
  %v1426 = vrot.slane %v1425, 4
  %v1427 = vmax.f32 %v1425, %v1426
  %v1428 = vrot.slane %v1427, 2
  %v1429 = vmax.f32 %v1427, %v1428
  %v1430 = vrot.slane %v1429, 1
  %v1431 = vmax.f32 %v1429, %v1430
  %v1432 = vsel %vm941, %v939, -inf
  %v1433 = vrot.slane %v1432, 4
  %v1434 = vmax.f32 %v1432, %v1433
  %v1435 = vrot.slane %v1434, 2
  %v1436 = vmax.f32 %v1434, %v1435
  %v1437 = vrot.slane %v1436, 1
  %v1438 = vmax.f32 %v1436, %v1437
  %v1439 = vsel %vm941, %v940, -inf
  %v1440 = vrot.slane %v1439, 4
  %v1441 = vmax.f32 %v1439, %v1440
  %v1442 = vrot.slane %v1441, 2
  %v1443 = vmax.f32 %v1441, %v1442
  %v1444 = vrot.slane %v1443, 1
  %v1445 = vmax.f32 %v1443, %v1444
  %v1446 = vpack.c.bf16 %v948, %v948
  %v1447 = vpack.c.bf16 %v955, %v955
  %v1448 = vpack.c.bf16 %v962, %v962
  %v1449 = vpack.c.bf16 %v969, %v969
  %v1450 = vpack.c.bf16 %v976, %v976
  %v1451 = vpack.c.bf16 %v983, %v983
  %v1452 = vpack.c.bf16 %v990, %v990
  %v1453 = vpack.c.bf16 %v997, %v997
  %v1454 = vpack.c.bf16 %v1004, %v1004
  %v1455 = vpack.c.bf16 %v1011, %v1011
  %v1456 = vpack.c.bf16 %v1018, %v1018
  %v1457 = vpack.c.bf16 %v1025, %v1025
  %v1458 = vpack.c.bf16 %v1032, %v1032
  %v1459 = vpack.c.bf16 %v1039, %v1039
  %v1460 = vpack.c.bf16 %v1046, %v1046
  %v1461 = vpack.c.bf16 %v1053, %v1053
  %v1462 = vpack.c.bf16 %v1060, %v1060
  %v1463 = vpack.c.bf16 %v1067, %v1067
  %v1464 = vpack.c.bf16 %v1074, %v1074
  %v1465 = vpack.c.bf16 %v1081, %v1081
  %v1466 = vpack.c.bf16 %v1088, %v1088
  %v1467 = vpack.c.bf16 %v1095, %v1095
  %v1468 = vpack.c.bf16 %v1102, %v1102
  %v1469 = vpack.c.bf16 %v1109, %v1109
  %v1470 = vpack.c.bf16 %v1116, %v1116
  %v1471 = vpack.c.bf16 %v1123, %v1123
  %v1472 = vpack.c.bf16 %v1130, %v1130
  %v1473 = vpack.c.bf16 %v1137, %v1137
  %v1474 = vpack.c.bf16 %v1144, %v1144
  %v1475 = vpack.c.bf16 %v1151, %v1151
  %v1476 = vpack.c.bf16 %v1158, %v1158
  %v1477 = vpack.c.bf16 %v1165, %v1165
  %v1478 = vpack.c.bf16 %v1172, %v1172
  %v1479 = vpack.c.bf16 %v1179, %v1179
  %v1480 = vpack.c.bf16 %v1186, %v1186
  %v1481 = vpack.c.bf16 %v1193, %v1193
  %v1482 = vpack.c.bf16 %v1200, %v1200
  %v1483 = vpack.c.bf16 %v1207, %v1207
  %v1484 = vpack.c.bf16 %v1214, %v1214
  %v1485 = vpack.c.bf16 %v1221, %v1221
  %v1486 = vpack.c.bf16 %v1228, %v1228
  %v1487 = vpack.c.bf16 %v1235, %v1235
  %v1488 = vpack.c.bf16 %v1242, %v1242
  %v1489 = vpack.c.bf16 %v1249, %v1249
  %v1490 = vpack.c.bf16 %v1256, %v1256
  %v1491 = vpack.c.bf16 %v1263, %v1263
  %v1492 = vpack.c.bf16 %v1270, %v1270
  %v1493 = vpack.c.bf16 %v1277, %v1277
  %v1494 = vpack.c.bf16 %v1284, %v1284
  %v1495 = vpack.c.bf16 %v1291, %v1291
  %v1496 = vpack.c.bf16 %v1298, %v1298
  %v1497 = vpack.c.bf16 %v1305, %v1305
  %v1498 = vpack.c.bf16 %v1312, %v1312
  %v1499 = vpack.c.bf16 %v1319, %v1319
  %v1500 = vpack.c.bf16 %v1326, %v1326
  %v1501 = vpack.c.bf16 %v1333, %v1333
  %v1502 = vpack.c.bf16 %v1340, %v1340
  %v1503 = vpack.c.bf16 %v1347, %v1347
  %v1504 = vpack.c.bf16 %v1354, %v1354
  %v1505 = vpack.c.bf16 %v1361, %v1361
  %v1506 = vpack.c.bf16 %v1368, %v1368
  %v1507 = vpack.c.bf16 %v1375, %v1375
  %v1508 = vpack.c.bf16 %v1382, %v1382
  %v1509 = vpack.c.bf16 %v1389, %v1389
  %v1510 = vpack.c.bf16 %v1396, %v1396
  %v1511 = vpack.c.bf16 %v1403, %v1403
  %v1512 = vpack.c.bf16 %v1410, %v1410
  %v1513 = vpack.c.bf16 %v1417, %v1417
  %v1514 = vpack.c.bf16 %v1424, %v1424
  %v1515 = vpack.c.bf16 %v1431, %v1431
  %v1516 = vpack.c.bf16 %v1438, %v1438
  %v1517 = vpack.c.bf16 %v1445, %v1445
  %v1590 = vunpack.c.l.b16 %v1446
  %v1591 = vunpack.c.l.b16 %v1447
  %v1592 = vunpack.c.l.b16 %v1448
  %v1593 = vunpack.c.l.b16 %v1449
  %v1594 = vunpack.c.l.b16 %v1450
  %v1595 = vunpack.c.l.b16 %v1451
  %v1596 = vunpack.c.l.b16 %v1452
  %v1597 = vunpack.c.l.b16 %v1453
  %v1598 = vunpack.c.l.b16 %v1454
  %v1599 = vunpack.c.l.b16 %v1455
  %v1600 = vunpack.c.l.b16 %v1456
  %v1601 = vunpack.c.l.b16 %v1457
  %v1602 = vunpack.c.l.b16 %v1458
  %v1603 = vunpack.c.l.b16 %v1459
  %v1604 = vunpack.c.l.b16 %v1460
  %v1605 = vunpack.c.l.b16 %v1461
  %v1606 = vunpack.c.l.b16 %v1462
  %v1607 = vunpack.c.l.b16 %v1463
  %v1608 = vunpack.c.l.b16 %v1464
  %v1609 = vunpack.c.l.b16 %v1465
  %v1610 = vunpack.c.l.b16 %v1466
  %v1611 = vunpack.c.l.b16 %v1467
  %v1612 = vunpack.c.l.b16 %v1468
  %v1613 = vunpack.c.l.b16 %v1469
  %v1614 = vunpack.c.l.b16 %v1470
  %v1615 = vunpack.c.l.b16 %v1471
  %v1616 = vunpack.c.l.b16 %v1472
  %v1617 = vunpack.c.l.b16 %v1473
  %v1618 = vunpack.c.l.b16 %v1474
  %v1619 = vunpack.c.l.b16 %v1475
  %v1620 = vunpack.c.l.b16 %v1476
  %v1621 = vunpack.c.l.b16 %v1477
  %v1622 = vunpack.c.l.b16 %v1478
  %v1623 = vunpack.c.l.b16 %v1479
  %v1624 = vunpack.c.l.b16 %v1480
  %v1625 = vunpack.c.l.b16 %v1481
  %v1626 = vunpack.c.l.b16 %v1482
  %v1627 = vunpack.c.l.b16 %v1483
  %v1628 = vunpack.c.l.b16 %v1484
  %v1629 = vunpack.c.l.b16 %v1485
  %v1630 = vunpack.c.l.b16 %v1486
  %v1631 = vunpack.c.l.b16 %v1487
  %v1632 = vunpack.c.l.b16 %v1488
  %v1633 = vunpack.c.l.b16 %v1489
  %v1634 = vunpack.c.l.b16 %v1490
  %v1635 = vunpack.c.l.b16 %v1491
  %v1636 = vunpack.c.l.b16 %v1492
  %v1637 = vunpack.c.l.b16 %v1493
  %v1638 = vunpack.c.l.b16 %v1494
  %v1639 = vunpack.c.l.b16 %v1495
  %v1640 = vunpack.c.l.b16 %v1496
  %v1641 = vunpack.c.l.b16 %v1497
  %v1642 = vunpack.c.l.b16 %v1498
  %v1643 = vunpack.c.l.b16 %v1499
  %v1644 = vunpack.c.l.b16 %v1500
  %v1645 = vunpack.c.l.b16 %v1501
  %v1646 = vunpack.c.l.b16 %v1502
  %v1647 = vunpack.c.l.b16 %v1503
  %v1648 = vunpack.c.l.b16 %v1504
  %v1649 = vunpack.c.l.b16 %v1505
  %v1650 = vunpack.c.l.b16 %v1506
  %v1651 = vunpack.c.l.b16 %v1507
  %v1652 = vunpack.c.l.b16 %v1508
  %v1653 = vunpack.c.l.b16 %v1509
  %v1654 = vunpack.c.l.b16 %v1510
  %v1655 = vunpack.c.l.b16 %v1511
  %v1656 = vunpack.c.l.b16 %v1512
  %v1657 = vunpack.c.l.b16 %v1513
  %v1658 = vunpack.c.l.b16 %v1514
  %v1659 = vunpack.c.l.b16 %v1515
  %v1660 = vunpack.c.l.b16 %v1516
  %v1661 = vunpack.c.l.b16 %v1517
  %v1662 = vpack.c.b16 %v1590, %v1590
  %v1663 = vpack.c.b16 %v1591, %v1591
  %v1664 = vpack.c.b16 %v1592, %v1592
  %v1665 = vpack.c.b16 %v1593, %v1593
  %v1666 = vpack.c.b16 %v1594, %v1594
  %v1667 = vpack.c.b16 %v1595, %v1595
  %v1668 = vpack.c.b16 %v1596, %v1596
  %v1669 = vpack.c.b16 %v1597, %v1597
  %v1670 = vpack.c.b16 %v1598, %v1598
  %v1671 = vpack.c.b16 %v1599, %v1599
  %v1672 = vpack.c.b16 %v1600, %v1600
  %v1673 = vpack.c.b16 %v1601, %v1601
  %v1674 = vpack.c.b16 %v1602, %v1602
  %v1675 = vpack.c.b16 %v1603, %v1603
  %v1676 = vpack.c.b16 %v1604, %v1604
  %v1677 = vpack.c.b16 %v1605, %v1605
  %v1678 = vpack.c.b16 %v1606, %v1606
  %v1679 = vpack.c.b16 %v1607, %v1607
  %v1680 = vpack.c.b16 %v1608, %v1608
  %v1681 = vpack.c.b16 %v1609, %v1609
  %v1682 = vpack.c.b16 %v1610, %v1610
  %v1683 = vpack.c.b16 %v1611, %v1611
  %v1684 = vpack.c.b16 %v1612, %v1612
  %v1685 = vpack.c.b16 %v1613, %v1613
  %v1686 = vpack.c.b16 %v1614, %v1614
  %v1687 = vpack.c.b16 %v1615, %v1615
  %v1688 = vpack.c.b16 %v1616, %v1616
  %v1689 = vpack.c.b16 %v1617, %v1617
  %v1690 = vpack.c.b16 %v1618, %v1618
  %v1691 = vpack.c.b16 %v1619, %v1619
  %v1692 = vpack.c.b16 %v1620, %v1620
  %v1693 = vpack.c.b16 %v1621, %v1621
  %v1694 = vpack.c.b16 %v1622, %v1622
  %v1695 = vpack.c.b16 %v1623, %v1623
  %v1696 = vpack.c.b16 %v1624, %v1624
  %v1697 = vpack.c.b16 %v1625, %v1625
  %v1698 = vpack.c.b16 %v1626, %v1626
  %v1699 = vpack.c.b16 %v1627, %v1627
  %v1700 = vpack.c.b16 %v1628, %v1628
  %v1701 = vpack.c.b16 %v1629, %v1629
  %v1702 = vpack.c.b16 %v1630, %v1630
  %v1703 = vpack.c.b16 %v1631, %v1631
  %v1704 = vpack.c.b16 %v1632, %v1632
  %v1705 = vpack.c.b16 %v1633, %v1633
  %v1706 = vpack.c.b16 %v1634, %v1634
  %v1707 = vpack.c.b16 %v1635, %v1635
  %v1708 = vpack.c.b16 %v1636, %v1636
  %v1709 = vpack.c.b16 %v1637, %v1637
  %v1710 = vpack.c.b16 %v1638, %v1638
  %v1711 = vpack.c.b16 %v1639, %v1639
  %v1712 = vpack.c.b16 %v1640, %v1640
  %v1713 = vpack.c.b16 %v1641, %v1641
  %v1714 = vpack.c.b16 %v1642, %v1642
  %v1715 = vpack.c.b16 %v1643, %v1643
  %v1716 = vpack.c.b16 %v1644, %v1644
  %v1717 = vpack.c.b16 %v1645, %v1645
  %v1718 = vpack.c.b16 %v1646, %v1646
  %v1719 = vpack.c.b16 %v1647, %v1647
  %v1720 = vpack.c.b16 %v1648, %v1648
  %v1721 = vpack.c.b16 %v1649, %v1649
  %v1722 = vpack.c.b16 %v1650, %v1650
  %v1723 = vpack.c.b16 %v1651, %v1651
  %v1724 = vpack.c.b16 %v1652, %v1652
  %v1725 = vpack.c.b16 %v1653, %v1653
  %v1726 = vpack.c.b16 %v1654, %v1654
  %v1727 = vpack.c.b16 %v1655, %v1655
  %v1728 = vpack.c.b16 %v1656, %v1656
  %v1729 = vpack.c.b16 %v1657, %v1657
  %v1730 = vpack.c.b16 %v1658, %v1658
  %v1731 = vpack.c.b16 %v1659, %v1659
  %v1732 = vpack.c.b16 %v1660, %v1660
  %v1733 = vpack.c.b16 %v1661, %v1661
  %v1734 = vunpack.c.l.b16 %v1662
  %v1735 = vunpack.c.l.b16 %v1663
  %v1736 = vunpack.c.l.b16 %v1664
  %v1737 = vunpack.c.l.b16 %v1665
  %v1738 = vunpack.c.l.b16 %v1666
  %v1739 = vunpack.c.l.b16 %v1667
  %v1740 = vunpack.c.l.b16 %v1668
  %v1741 = vunpack.c.l.b16 %v1669
  %v1742 = vunpack.c.l.b16 %v1670
  %v1743 = vunpack.c.l.b16 %v1671
  %v1744 = vunpack.c.l.b16 %v1672
  %v1745 = vunpack.c.l.b16 %v1673
  %v1746 = vunpack.c.l.b16 %v1674
  %v1747 = vunpack.c.l.b16 %v1675
  %v1748 = vunpack.c.l.b16 %v1676
  %v1749 = vunpack.c.l.b16 %v1677
  %v1750 = vunpack.c.l.b16 %v1678
  %v1751 = vunpack.c.l.b16 %v1679
  %v1752 = vunpack.c.l.b16 %v1680
  %v1753 = vunpack.c.l.b16 %v1681
  %v1754 = vunpack.c.l.b16 %v1682
  %v1755 = vunpack.c.l.b16 %v1683
  %v1756 = vunpack.c.l.b16 %v1684
  %v1757 = vunpack.c.l.b16 %v1685
  %v1758 = vunpack.c.l.b16 %v1686
  %v1759 = vunpack.c.l.b16 %v1687
  %v1760 = vunpack.c.l.b16 %v1688
  %v1761 = vunpack.c.l.b16 %v1689
  %v1762 = vunpack.c.l.b16 %v1690
  %v1763 = vunpack.c.l.b16 %v1691
  %v1764 = vunpack.c.l.b16 %v1692
  %v1765 = vunpack.c.l.b16 %v1693
  %v1766 = vunpack.c.l.b16 %v1694
  %v1767 = vunpack.c.l.b16 %v1695
  %v1768 = vunpack.c.l.b16 %v1696
  %v1769 = vunpack.c.l.b16 %v1697
  %v1770 = vunpack.c.l.b16 %v1698
  %v1771 = vunpack.c.l.b16 %v1699
  %v1772 = vunpack.c.l.b16 %v1700
  %v1773 = vunpack.c.l.b16 %v1701
  %v1774 = vunpack.c.l.b16 %v1702
  %v1775 = vunpack.c.l.b16 %v1703
  %v1776 = vunpack.c.l.b16 %v1704
  %v1777 = vunpack.c.l.b16 %v1705
  %v1778 = vunpack.c.l.b16 %v1706
  %v1779 = vunpack.c.l.b16 %v1707
  %v1780 = vunpack.c.l.b16 %v1708
  %v1781 = vunpack.c.l.b16 %v1709
  %v1782 = vunpack.c.l.b16 %v1710
  %v1783 = vunpack.c.l.b16 %v1711
  %v1784 = vunpack.c.l.b16 %v1712
  %v1785 = vunpack.c.l.b16 %v1713
  %v1786 = vunpack.c.l.b16 %v1714
  %v1787 = vunpack.c.l.b16 %v1715
  %v1788 = vunpack.c.l.b16 %v1716
  %v1789 = vunpack.c.l.b16 %v1717
  %v1790 = vunpack.c.l.b16 %v1718
  %v1791 = vunpack.c.l.b16 %v1719
  %v1792 = vunpack.c.l.b16 %v1720
  %v1793 = vunpack.c.l.b16 %v1721
  %v1794 = vunpack.c.l.b16 %v1722
  %v1795 = vunpack.c.l.b16 %v1723
  %v1796 = vunpack.c.l.b16 %v1724
  %v1797 = vunpack.c.l.b16 %v1725
  %v1798 = vunpack.c.l.b16 %v1726
  %v1799 = vunpack.c.l.b16 %v1727
  %v1800 = vunpack.c.l.b16 %v1728
  %v1801 = vunpack.c.l.b16 %v1729
  %v1802 = vunpack.c.l.b16 %v1730
  %v1803 = vunpack.c.l.b16 %v1731
  %v1804 = vunpack.c.l.b16 %v1732
  %v1805 = vunpack.c.l.b16 %v1733
  %vm1806 = vcmask 1041409
  %v1807 = vsel %vm1806, %v1735, %v1734
  %vm1808 = vcmask 1042434
  %v1809 = vsel %vm1808, %v1736, %v1807
  %vm1810 = vcmask 1043459
  %v1811 = vsel %vm1810, %v1737, %v1809
  %vm1812 = vcmask 1044484
  %v1813 = vsel %vm1812, %v1738, %v1811
  %vm1814 = vcmask 1045509
  %v1815 = vsel %vm1814, %v1739, %v1813
  %vm1816 = vcmask 1046534
  %v1817 = vsel %vm1816, %v1740, %v1815
  %vm1818 = vcmask 1047559
  %v1819 = vsel %vm1818, %v1741, %v1817
  %v1820 = vsel %vm1806, %v1743, %v1742
  %v1821 = vsel %vm1808, %v1744, %v1820
  %v1822 = vsel %vm1810, %v1745, %v1821
  %v1823 = vsel %vm1812, %v1746, %v1822
  %v1824 = vsel %vm1814, %v1747, %v1823
  %v1825 = vsel %vm1816, %v1748, %v1824
  %v1826 = vsel %vm1818, %v1749, %v1825
  %v1827 = vsel %vm1806, %v1751, %v1750
  %v1828 = vsel %vm1808, %v1752, %v1827
  %v1829 = vsel %vm1810, %v1753, %v1828
  %v1830 = vsel %vm1812, %v1754, %v1829
  %v1831 = vsel %vm1814, %v1755, %v1830
  %v1832 = vsel %vm1816, %v1756, %v1831
  %v1833 = vsel %vm1818, %v1757, %v1832
  %v1834 = vsel %vm1806, %v1759, %v1758
  %v1835 = vsel %vm1808, %v1760, %v1834
  %v1836 = vsel %vm1810, %v1761, %v1835
  %v1837 = vsel %vm1812, %v1762, %v1836
  %v1838 = vsel %vm1814, %v1763, %v1837
  %v1839 = vsel %vm1816, %v1764, %v1838
  %v1840 = vsel %vm1818, %v1765, %v1839
  %v1841 = vsel %vm1806, %v1767, %v1766
  %v1842 = vsel %vm1808, %v1768, %v1841
  %v1843 = vsel %vm1810, %v1769, %v1842
  %v1844 = vsel %vm1812, %v1770, %v1843
  %v1845 = vsel %vm1814, %v1771, %v1844
  %v1846 = vsel %vm1816, %v1772, %v1845
  %v1847 = vsel %vm1818, %v1773, %v1846
  %v1848 = vsel %vm1806, %v1775, %v1774
  %v1849 = vsel %vm1808, %v1776, %v1848
  %v1850 = vsel %vm1810, %v1777, %v1849
  %v1851 = vsel %vm1812, %v1778, %v1850
  %v1852 = vsel %vm1814, %v1779, %v1851
  %v1853 = vsel %vm1816, %v1780, %v1852
  %v1854 = vsel %vm1818, %v1781, %v1853
  %v1855 = vsel %vm1806, %v1783, %v1782
  %v1856 = vsel %vm1808, %v1784, %v1855
  %v1857 = vsel %vm1810, %v1785, %v1856
  %v1858 = vsel %vm1812, %v1786, %v1857
  %v1859 = vsel %vm1814, %v1787, %v1858
  %v1860 = vsel %vm1816, %v1788, %v1859
  %v1861 = vsel %vm1818, %v1789, %v1860
  %v1862 = vsel %vm1806, %v1791, %v1790
  %v1863 = vsel %vm1808, %v1792, %v1862
  %v1864 = vsel %vm1810, %v1793, %v1863
  %v1865 = vsel %vm1812, %v1794, %v1864
  %v1866 = vsel %vm1814, %v1795, %v1865
  %v1867 = vsel %vm1816, %v1796, %v1866
  %v1868 = vsel %vm1818, %v1797, %v1867
  %v1869 = vsel %vm1806, %v1799, %v1798
  %v1870 = vsel %vm1808, %v1800, %v1869
  %v1871 = vsel %vm1810, %v1801, %v1870
  %v1872 = vsel %vm1812, %v1802, %v1871
  %v1873 = vsel %vm1814, %v1803, %v1872
  %v1874 = vsel %vm1816, %v1804, %v1873
  %v1875 = vsel %vm1818, %v1805, %v1874
  %v1876 = vpack.c.b16 %v1819, %v1819
  %v1877 = vpack.c.b16 %v1826, %v1826
  %v1878 = vpack.c.b16 %v1833, %v1833
  %v1879 = vpack.c.b16 %v1840, %v1840
  %v1880 = vpack.c.b16 %v1847, %v1847
  %v1881 = vpack.c.b16 %v1854, %v1854
  %v1882 = vpack.c.b16 %v1861, %v1861
  %v1883 = vpack.c.b16 %v1868, %v1868
  %v1884 = vpack.c.b16 %v1875, %v1875
  %vm1894 = vcmask 519168
  %1895 = vst.msk [vmem:[%s4] sm:$0xf] %vm1894, %v1876
  %1896 = vst.msk [vmem:[%s4 + $0x4] sm:$0xf] %vm1894, %v1877
  %1897 = vst.msk [vmem:[%s4 + $0x8] sm:$0xf] %vm1894, %v1878
  %1898 = vst.msk [vmem:[%s4 + $0xc] sm:$0xf] %vm1894, %v1879
  %1899 = vst.msk [vmem:[%s4 + $0x10] sm:$0xf] %vm1894, %v1880
  %1900 = vst.msk [vmem:[%s4 + $0x14] sm:$0xf] %vm1894, %v1881
  %1901 = vst.msk [vmem:[%s4 + $0x18] sm:$0xf] %vm1894, %v1882
  %1902 = vst.msk [vmem:[%s4 + $0x1c] sm:$0xf] %vm1894, %v1883
  %1903 = vst.msk [vmem:[%s4 + $0x20] sm:$0xf] %vm1894, %v1884
  // Predicated region
  $region18: #{tpu_custom_call.1} parent=0 // pred_check
    _
  $region19: #{tpu_custom_call.1} parent=0 // pred_check_branch
    %1905 = sbr.rel (0) target = $region21
  $region20: #{tpu_custom_call.1} parent=0 // pred_region
    _
  $region21: #{tpu_custom_call.1} parent=0 // pred_fallthru
    _
  // Predicated region
  $region22: #{tpu_custom_call.1} parent=0 // pred_check
    _
  $region23: #{tpu_custom_call.1} parent=0 // pred_check_branch
    %1907 = sbr.rel (0) target = $region25
  $region24: #{tpu_custom_call.1} parent=0 // pred_region
    _
  $region25: #{tpu_custom_call.1} parent=0 // pred_fallthru
    _

</llo_original>
